<compile_context>
chip_gen: v6e
topology: v6e:2x2x1
jax: 0.10.0
libtpu: 0.0.40
codegen_flags: <defaults>
</compile_context>

<pallas_src>
import jax
import jax.numpy as jnp
from jax import lax
from jax.experimental import pallas as pl
from jax.experimental.pallas import tpu as pltpu

HIDDEN = 32          # logical LSTM hidden size
HP = 128             # lane-padded hidden size (one full vreg lane width)
GATES = 4 * HP       # packed gate-slab lane width (i|f|g|o blocks)
SUBLANE = 8
DIN_PAD = 8          # state_dim + action_dim padded to a sublane multiple
NQ_PAD = 128         # lane-dense padding of the Linear2 output column

# Row offsets of the packed parameter slab (see pack_params).
_R_BIAS = 0                       # (8, GATES): row0=b1, row1=b_lstm, row2=b2
_R_W1 = _R_BIAS + SUBLANE         # (DIN_PAD, GATES): Linear1 W in [:, :HP]
_R_WIH = _R_W1 + DIN_PAD          # (HP, GATES): LSTM W_ih (gate-blocked)
_R_WHH = _R_WIH + HP              # (HP, GATES): LSTM W_hh (gate-blocked)
_R_W2 = _R_WHH + HP               # (HP, GATES): Linear2 W in [:, :NQ_PAD]
_R_TOTAL = _R_W2 + HP             # 400 rows total


def _critic_kernel(x_ref, h0_ref, c0_ref, p_ref,
                   q_ref, h_out_ref, c_out_ref,
                   gx_ref, h_all_ref):
    """Single-invocation Critic forward.

    x_ref:   (T*Bp, DIN_PAD)  time-major, batch-padded input (state||action)
    h0/c0:   (Bp, HP)         initial hidden / cell state (lane-padded)
    p_ref:   (400, GATES)     packed parameter slab (see pack_params)
    q_ref:   (T*Bp, NQ_PAD)   lane-dense Q slab (col 0 = q value)
    h_out/c_out: (Bp, HP)     final hidden / cell state (lane-padded)
    gx_ref:  (T*Bp, GATES)    scratch: x1 @ W_ih + bias (pre-scaled gates)
    h_all:   (T*Bp, HP)       scratch: h_t for every step (batched Linear2)
    """
    TB, _ = x_ref.shape
    Bp, _ = h0_ref.shape
    T = TB // Bp

    # Static, tile-aligned views into the packed parameter slab.
    b1 = p_ref[_R_BIAS + 0:_R_BIAS + 1, 0:HP]              # (1, HP)
    blstm = p_ref[_R_BIAS + 1:_R_BIAS + 2, :]               # (1, GATES)
    b2 = p_ref[_R_BIAS + 2:_R_BIAS + 3, 0:NQ_PAD]           # (1, NQ_PAD)
    w1 = p_ref[_R_W1:_R_W1 + DIN_PAD, 0:HP]                 # (DIN_PAD, HP)
    wih = p_ref[_R_WIH:_R_WIH + HP, :]                      # (HP, GATES)
    whh = p_ref[_R_WHH:_R_WHH + HP, :]                      # (HP, GATES)
    w2 = p_ref[_R_W2:_R_W2 + HP, 0:NQ_PAD]                  # (HP, NQ_PAD)

    # ---- Phase 1: batched, time-independent matmuls (lane-dense MXU work) ----
    x1 = jnp.dot(x_ref[...], w1, preferred_element_type=jnp.float32) + b1
    x1 = jnp.maximum(x1, 0.0)                               # (T*Bp, HP)
    gx_ref[...] = (jnp.dot(x1, wih, preferred_element_type=jnp.float32)
                   + blstm)                                  # (T*Bp, GATES)

    # ---- Phase 2: serial LSTM recurrence (only h @ W_hh on critical path) ---
    # i/f/o columns of wih/whh/blstm were pre-scaled by 0.5 at pack time, so a
    # single tanh over the whole gate slab yields tanh(g) for the g block and
    # tanh(x/2) for i/f/o, from which sigmoid(x) = 0.5 + 0.5*tanh(x/2).
    def step(t, carry):
        h, c = carry
        row = pl.multiple_of(t * Bp, Bp)
        gates = gx_ref[pl.ds(row, Bp), :] + jnp.dot(
            h, whh, preferred_element_type=jnp.float32)      # (Bp, GATES)
        th = jnp.tanh(gates)              # one EUP pass over all 4 gate blocks
        i_g = 0.5 * th[:, 0 * HP:1 * HP] + 0.5
        f_g = 0.5 * th[:, 1 * HP:2 * HP] + 0.5
        g_g = th[:, 2 * HP:3 * HP]
        o_g = 0.5 * th[:, 3 * HP:4 * HP] + 0.5
        c = f_g * c + i_g * g_g
        h = o_g * jnp.tanh(c)
        h_all_ref[pl.ds(row, Bp), :] = h
        return (h, c)

    h_f, c_f = lax.fori_loop(0, T, step,
                             (h0_ref[...], c0_ref[...]), unroll=8)
    h_out_ref[...] = h_f
    c_out_ref[...] = c_f

    # ---- Phase 3: one batched Linear2 over all steps, lane-dense output -----
    q_ref[...] = (jnp.dot(h_all_ref[...], w2,
                          preferred_element_type=jnp.float32) + b2)


def pack_params(params):
    """Lane-pad + pack all Critic parameters into one (400, 512) f32 slab.

    Called ONCE at setup (not inside the jitted per-call forward).  Each gate
    (i|f|g|o) occupies its own 128-lane block; i/f/o weight and bias columns
    are pre-scaled by 0.5 so the kernel evaluates sigmoids via a single tanh
    (scaling by 0.5 is exact in f32).  Padded rows/lanes are zero, which keeps
    padded hidden lanes exactly zero through the recurrence.
    """
    w1, b1, wih, whh, blstm, w2, b2 = params
    Din, H = w1.shape
    assert H == HIDDEN and Din <= DIN_PAD

    gate_scale = (0.5, 0.5, 1.0, 0.5)        # i, f, g, o

    def gate_block(m):                        # (K, 4H) -> (K, GATES)
        K = m.shape[0]
        out = jnp.zeros((K, GATES), jnp.float32)
        for g in range(4):
            out = out.at[:, g * HP:g * HP + H].set(
                gate_scale[g] * m[:, g * H:(g + 1) * H])
        return out

    bias = jnp.zeros((SUBLANE, GATES), jnp.float32)
    bias = bias.at[0, :H].set(b1[0])
    bias = bias.at[1, :].set(gate_block(blstm)[0])
    bias = bias.at[2, 0:1].set(b2[0])

    w1p = jnp.zeros((DIN_PAD, GATES), jnp.float32).at[:Din, :H].set(w1)
    wihp = jnp.zeros((HP, GATES), jnp.float32).at[:H, :].set(gate_block(wih))
    whhp = jnp.zeros((HP, GATES), jnp.float32).at[:H, :].set(gate_block(whh))
    w2p = jnp.zeros((HP, GATES), jnp.float32).at[:H, 0:1].set(w2)

    slab = jnp.concatenate([bias, w1p, wihp, whhp, w2p], axis=0)
    assert slab.shape == (_R_TOTAL, GATES)
    return slab


@jax.jit
def critic_forward(state, action, h, c, packed):
    """state:(B,T,Sd) action:(B,T,Ad) h,c:(1,B,H) packed:(400,512)
    -> (q:(B,T,1), h':(1,B,H), c':(1,B,H))."""
    B, T, sd = state.shape
    ad = action.shape[2]
    H = HIDDEN
    Bp = ((B + SUBLANE - 1) // SUBLANE) * SUBLANE

    # (B,T,Din) -> time-major, batch/feature-padded (T*Bp, DIN_PAD); the
    # feature padding is folded into the concatenate (one XLA op).
    pad_f = jnp.zeros((B, T, DIN_PAD - (sd + ad)), jnp.float32)
    x = jnp.concatenate([state.astype(jnp.float32),
                         action.astype(jnp.float32), pad_f], axis=2)
    x = jnp.transpose(x, (1, 0, 2))                         # (T, B, DIN_PAD)
    x = jnp.pad(x, ((0, 0), (0, Bp - B), (0, 0)))           # (T, Bp, DIN_PAD)
    x2 = x.reshape(T * Bp, DIN_PAD)                         # row = t*Bp + b

    h0 = jnp.pad(h[0].astype(jnp.float32), ((0, Bp - B), (0, HP - H)))
    c0 = jnp.pad(c[0].astype(jnp.float32), ((0, Bp - B), (0, HP - H)))

    vmem = pl.BlockSpec(memory_space=pltpu.MemorySpace.VMEM)

    q_slab, h_new, c_new = pl.pallas_call(
        _critic_kernel,
        out_shape=(
            jax.ShapeDtypeStruct((T * Bp, NQ_PAD), jnp.float32),
            jax.ShapeDtypeStruct((Bp, HP), jnp.float32),
            jax.ShapeDtypeStruct((Bp, HP), jnp.float32),
        ),
        in_specs=[vmem, vmem, vmem, vmem],
        out_specs=(vmem, vmem, vmem),
        scratch_shapes=[
            pltpu.VMEM((T * Bp, GATES), jnp.float32),   # gx = x1 @ W_ih + b
            pltpu.VMEM((T * Bp, HP), jnp.float32),      # h_t slab
        ],
        compiler_params=pltpu.CompilerParams(
            vmem_limit_bytes=32 * 1024 * 1024),
    )(x2, h0, c0, packed)

    q = q_slab[:, 0].reshape(T, Bp)[:, :B]                  # (T, B)
    q = jnp.transpose(q)[..., None]                         # (B, T, 1)
    return q, h_new[:B, :H][None], c_new[:B, :H][None]


def make_params(key, state_dim, action_dim, hidden=HIDDEN):
    """Deterministic synthetic parameters (PyTorch-style uniform init)."""
    Din = state_dim + action_dim
    ks = jax.random.split(key, 7)
    u = lambda k, shape, bound: jax.random.uniform(
        k, shape, jnp.float32, -bound, bound)

    b1_bound = 1.0 / jnp.sqrt(Din)
    bl_bound = 1.0 / jnp.sqrt(hidden)

    w1 = u(ks[0], (Din, hidden), b1_bound)          # Linear1 weight (transposed)
    b1 = u(ks[1], (1, hidden), b1_bound)
    wih = u(ks[2], (hidden, 4 * hidden), bl_bound)  # LSTM weight_ih (transposed)
    whh = u(ks[3], (hidden, 4 * hidden), bl_bound)  # LSTM weight_hh (transposed)
    blstm = u(ks[4], (1, 4 * hidden), bl_bound)     # bias_ih + bias_hh folded
    w2 = u(ks[5], (hidden, 1), bl_bound)            # Linear2 weight (transposed)
    b2 = u(ks[6], (1, 1), bl_bound)
    return (w1, b1, wih, whh, blstm, w2, b2)


def reference_forward(state, action, h, c, params):
    """Pure-JAX reference (lax.scan LSTM) matching PyTorch semantics."""
    w1, b1, wih, whh, blstm, w2, b2 = params
    H = HIDDEN
    x = jnp.concatenate([state, action], axis=2)
    x1 = jax.nn.relu(x @ w1 + b1)                   # (B, T, H)

    def step(carry, xt):
        hprev, cprev = carry
        gates = xt @ wih + hprev @ whh + blstm
        i = jax.nn.sigmoid(gates[:, 0 * H:1 * H])
        f = jax.nn.sigmoid(gates[:, 1 * H:2 * H])
        g = jnp.tanh(gates[:, 2 * H:3 * H])
        o = jax.nn.sigmoid(gates[:, 3 * H:4 * H])
        cn = f * cprev + i * g
        hn = o * jnp.tanh(cn)
        return (hn, cn), hn

    (hT, cT), hs = jax.lax.scan(step, (h[0], c[0]),
                                jnp.transpose(x1, (1, 0, 2)))
    hs = jnp.transpose(hs, (1, 0, 2))               # (B, T, H)
    q = hs @ w2 + b2
    return q, hT[None], cT[None]


if __name__ == "__main__":
    B, T = 2, 8
    state_dim, action_dim = 4, 2

    key = jax.random.PRNGKey(0)
    k_s, k_a, k_p = jax.random.split(key, 3)

    state = jax.random.normal(k_s, (B, T, state_dim), jnp.float32)
    action = jax.random.normal(k_a, (B, T, action_dim), jnp.float32)
    h0 = jnp.zeros((1, B, HIDDEN), jnp.float32)
    c0 = jnp.zeros((1, B, HIDDEN), jnp.float32)

    params = make_params(k_p, state_dim, action_dim)
    packed = jax.block_until_ready(pack_params(params))   # one-time param pack

    q, new_h, new_c = critic_forward(state, action, h0, c0, packed)
    jax.block_until_ready((q, new_h, new_c))

    # Correctness check vs. pure-JAX reference.
    q_ref, h_ref, c_ref = reference_forward(state, action, h0, c0, params)
    assert jnp.allclose(q, q_ref, atol=1e-5), "q mismatch"
    assert jnp.allclose(new_h, h_ref, atol=1e-5), "h mismatch"
    assert jnp.allclose(new_c, c_ref, atol=1e-5), "c mismatch"

    print("KERNEL_OK")
</pallas_src>

<mosaic_0001>
module attributes {stable_mosaic.version = 11 : i64} {
  func.func @_critic_kernel(%arg0: memref<64x8xf32, #tpu.memory_space<vmem>>, %arg1: memref<8x128xf32, #tpu.memory_space<vmem>>, %arg2: memref<8x128xf32, #tpu.memory_space<vmem>>, %arg3: memref<400x512xf32, #tpu.memory_space<vmem>>, %arg4: memref<64x128xf32, #tpu.memory_space<vmem>>, %arg5: memref<8x128xf32, #tpu.memory_space<vmem>>, %arg6: memref<8x128xf32, #tpu.memory_space<vmem>>, %arg7: memref<64x512xf32, #tpu.memory_space<vmem>>, %arg8: memref<64x128xf32, #tpu.memory_space<vmem>>) attributes {dimension_semantics = [], scalar_prefetch = 0 : i64, scratch_operands = 2 : i64, tpu.core_type = #tpu.core_type<tc>} {
    %c0 = arith.constant 0 : index
    %c0_0 = arith.constant 0 : index
    %0 = vector.load %arg3[%c0, %c0_0] : memref<400x512xf32, #tpu.memory_space<vmem>>, vector<1x128xf32>
    %c1 = arith.constant 1 : index
    %c0_1 = arith.constant 0 : index
    %1 = vector.load %arg3[%c1, %c0_1] : memref<400x512xf32, #tpu.memory_space<vmem>>, vector<1x512xf32>
    %c2 = arith.constant 2 : index
    %c0_2 = arith.constant 0 : index
    %2 = vector.load %arg3[%c2, %c0_2] : memref<400x512xf32, #tpu.memory_space<vmem>>, vector<1x128xf32>
    %c8 = arith.constant 8 : index
    %c0_3 = arith.constant 0 : index
    %3 = vector.load %arg3[%c8, %c0_3] : memref<400x512xf32, #tpu.memory_space<vmem>>, vector<8x128xf32>
    %c16 = arith.constant 16 : index
    %c0_4 = arith.constant 0 : index
    %4 = vector.load %arg3[%c16, %c0_4] : memref<400x512xf32, #tpu.memory_space<vmem>>, vector<128x512xf32>
    %c144 = arith.constant 144 : index
    %c0_5 = arith.constant 0 : index
    %5 = vector.load %arg3[%c144, %c0_5] : memref<400x512xf32, #tpu.memory_space<vmem>>, vector<128x512xf32>
    %c272 = arith.constant 272 : index
    %c0_6 = arith.constant 0 : index
    %6 = vector.load %arg3[%c272, %c0_6] : memref<400x512xf32, #tpu.memory_space<vmem>>, vector<128x128xf32>
    %c0_7 = arith.constant 0 : index
    %c0_8 = arith.constant 0 : index
    %7 = vector.load %arg0[%c0_7, %c0_8] : memref<64x8xf32, #tpu.memory_space<vmem>>, vector<64x8xf32>
    %cst = arith.constant dense<0.000000e+00> : vector<64x128xf32>
    %8 = tpu.matmul %7, %3, %cst {dimension_numbers = #tpu.dot_dimension_numbers<[1], [0], [0], [1], [0, 0, 1, 1], [], []>} : vector<64x8xf32>, vector<8x128xf32>, vector<64x128xf32> -> vector<64x128xf32>
    %9 = vector.broadcast %0 : vector<1x128xf32> to vector<64x128xf32>
    %10 = arith.addf %8, %9 : vector<64x128xf32>
    %cst_9 = arith.constant 0.000000e+00 : f32
    %11 = vector.broadcast %cst_9 : f32 to vector<64x128xf32>
    %12 = arith.maximumf %10, %11 : vector<64x128xf32>
    %cst_10 = arith.constant dense<0.000000e+00> : vector<64x512xf32>
    %13 = tpu.matmul %12, %4, %cst_10 {dimension_numbers = #tpu.dot_dimension_numbers<[1], [0], [0], [1], [0, 0, 1, 1], [], []>} : vector<64x128xf32>, vector<128x512xf32>, vector<64x512xf32> -> vector<64x512xf32>
    %14 = vector.broadcast %1 : vector<1x512xf32> to vector<64x512xf32>
    %15 = arith.addf %13, %14 : vector<64x512xf32>
    %c0_11 = arith.constant 0 : index
    %c0_12 = arith.constant 0 : index
    %16 = vector.load %arg7[%c0_11, %c0_12] : memref<64x512xf32, #tpu.memory_space<vmem>>, vector<64x512xf32>
    tpu.vector_store %arg7[%c0_11, %c0_12], %15 {strides = array<i32>} : memref<64x512xf32, #tpu.memory_space<vmem>>, vector<64x512xf32>,
    %c0_13 = arith.constant 0 : index
    %c0_14 = arith.constant 0 : index
    %17 = vector.load %arg1[%c0_13, %c0_14] : memref<8x128xf32, #tpu.memory_space<vmem>>, vector<8x128xf32>
    %c0_15 = arith.constant 0 : index
    %c0_16 = arith.constant 0 : index
    %18 = vector.load %arg2[%c0_15, %c0_16] : memref<8x128xf32, #tpu.memory_space<vmem>>, vector<8x128xf32>
    %c0_i32 = arith.constant 0 : i32
    %c8_i32 = arith.constant 8 : i32
    %19 = arith.muli %c0_i32, %c8_i32 : i32
    %20 = tpu.assume_multiple %19, 8 : i32
    %21 = arith.index_cast %20 : i32 to index
    %c0_17 = arith.constant 0 : index
    %22 = vector.load %arg7[%21, %c0_17] : memref<64x512xf32, #tpu.memory_space<vmem>>, vector<8x512xf32>
    %cst_18 = arith.constant dense<0.000000e+00> : vector<8x512xf32>
    %23 = tpu.matmul %17, %5, %cst_18 {dimension_numbers = #tpu.dot_dimension_numbers<[1], [0], [0], [1], [0, 0, 1, 1], [], []>} : vector<8x128xf32>, vector<128x512xf32>, vector<8x512xf32> -> vector<8x512xf32>
    %24 = arith.addf %22, %23 : vector<8x512xf32>
    %25 = math.tanh %24 : vector<8x512xf32>
    %26 = vector.extract_strided_slice %25 {offsets = [0, 0], sizes = [8, 128], strides = [1, 1]} : vector<8x512xf32> to vector<8x128xf32>
    %cst_19 = arith.constant 5.000000e-01 : f32
    %27 = vector.broadcast %cst_19 : f32 to vector<8x128xf32>
    %28 = arith.mulf %27, %26 : vector<8x128xf32>
    %cst_20 = arith.constant 5.000000e-01 : f32
    %29 = vector.broadcast %cst_20 : f32 to vector<8x128xf32>
    %30 = arith.addf %28, %29 : vector<8x128xf32>
    %31 = vector.extract_strided_slice %25 {offsets = [0, 128], sizes = [8, 128], strides = [1, 1]} : vector<8x512xf32> to vector<8x128xf32>
    %cst_21 = arith.constant 5.000000e-01 : f32
    %32 = vector.broadcast %cst_21 : f32 to vector<8x128xf32>
    %33 = arith.mulf %32, %31 : vector<8x128xf32>
    %cst_22 = arith.constant 5.000000e-01 : f32
    %34 = vector.broadcast %cst_22 : f32 to vector<8x128xf32>
    %35 = arith.addf %33, %34 : vector<8x128xf32>
    %36 = vector.extract_strided_slice %25 {offsets = [0, 256], sizes = [8, 128], strides = [1, 1]} : vector<8x512xf32> to vector<8x128xf32>
    %37 = vector.extract_strided_slice %25 {offsets = [0, 384], sizes = [8, 128], strides = [1, 1]} : vector<8x512xf32> to vector<8x128xf32>
    %cst_23 = arith.constant 5.000000e-01 : f32
    %38 = vector.broadcast %cst_23 : f32 to vector<8x128xf32>
    %39 = arith.mulf %38, %37 : vector<8x128xf32>
    %cst_24 = arith.constant 5.000000e-01 : f32
    %40 = vector.broadcast %cst_24 : f32 to vector<8x128xf32>
    %41 = arith.addf %39, %40 : vector<8x128xf32>
    %42 = arith.mulf %35, %18 : vector<8x128xf32>
    %43 = arith.mulf %30, %36 : vector<8x128xf32>
    %44 = arith.addf %42, %43 : vector<8x128xf32>
    %45 = math.tanh %44 : vector<8x128xf32>
    %46 = arith.mulf %41, %45 : vector<8x128xf32>
    %47 = arith.index_cast %20 : i32 to index
    %c0_25 = arith.constant 0 : index
    %48 = vector.load %arg8[%47, %c0_25] : memref<64x128xf32, #tpu.memory_space<vmem>>, vector<8x128xf32>
    tpu.vector_store %arg8[%47, %c0_25], %46 {strides = array<i32>} : memref<64x128xf32, #tpu.memory_space<vmem>>, vector<8x128xf32>,
    %c1_i32 = arith.constant 1 : i32
    %c8_i32_26 = arith.constant 8 : i32
    %49 = arith.muli %c1_i32, %c8_i32_26 : i32
    %50 = tpu.assume_multiple %49, 8 : i32
    %51 = arith.index_cast %50 : i32 to index
    %c0_27 = arith.constant 0 : index
    %52 = vector.load %arg7[%51, %c0_27] : memref<64x512xf32, #tpu.memory_space<vmem>>, vector<8x512xf32>
    %cst_28 = arith.constant dense<0.000000e+00> : vector<8x512xf32>
    %53 = tpu.matmul %46, %5, %cst_28 {dimension_numbers = #tpu.dot_dimension_numbers<[1], [0], [0], [1], [0, 0, 1, 1], [], []>} : vector<8x128xf32>, vector<128x512xf32>, vector<8x512xf32> -> vector<8x512xf32>
    %54 = arith.addf %52, %53 : vector<8x512xf32>
    %55 = math.tanh %54 : vector<8x512xf32>
    %56 = vector.extract_strided_slice %55 {offsets = [0, 0], sizes = [8, 128], strides = [1, 1]} : vector<8x512xf32> to vector<8x128xf32>
    %cst_29 = arith.constant 5.000000e-01 : f32
    %57 = vector.broadcast %cst_29 : f32 to vector<8x128xf32>
    %58 = arith.mulf %57, %56 : vector<8x128xf32>
    %cst_30 = arith.constant 5.000000e-01 : f32
    %59 = vector.broadcast %cst_30 : f32 to vector<8x128xf32>
    %60 = arith.addf %58, %59 : vector<8x128xf32>
    %61 = vector.extract_strided_slice %55 {offsets = [0, 128], sizes = [8, 128], strides = [1, 1]} : vector<8x512xf32> to vector<8x128xf32>
    %cst_31 = arith.constant 5.000000e-01 : f32
    %62 = vector.broadcast %cst_31 : f32 to vector<8x128xf32>
    %63 = arith.mulf %62, %61 : vector<8x128xf32>
    %cst_32 = arith.constant 5.000000e-01 : f32
    %64 = vector.broadcast %cst_32 : f32 to vector<8x128xf32>
    %65 = arith.addf %63, %64 : vector<8x128xf32>
    %66 = vector.extract_strided_slice %55 {offsets = [0, 256], sizes = [8, 128], strides = [1, 1]} : vector<8x512xf32> to vector<8x128xf32>
    %67 = vector.extract_strided_slice %55 {offsets = [0, 384], sizes = [8, 128], strides = [1, 1]} : vector<8x512xf32> to vector<8x128xf32>
    %cst_33 = arith.constant 5.000000e-01 : f32
    %68 = vector.broadcast %cst_33 : f32 to vector<8x128xf32>
    %69 = arith.mulf %68, %67 : vector<8x128xf32>
    %cst_34 = arith.constant 5.000000e-01 : f32
    %70 = vector.broadcast %cst_34 : f32 to vector<8x128xf32>
    %71 = arith.addf %69, %70 : vector<8x128xf32>
    %72 = arith.mulf %65, %44 : vector<8x128xf32>
    %73 = arith.mulf %60, %66 : vector<8x128xf32>
    %74 = arith.addf %72, %73 : vector<8x128xf32>
    %75 = math.tanh %74 : vector<8x128xf32>
    %76 = arith.mulf %71, %75 : vector<8x128xf32>
    %77 = arith.index_cast %50 : i32 to index
    %c0_35 = arith.constant 0 : index
    %78 = vector.load %arg8[%77, %c0_35] : memref<64x128xf32, #tpu.memory_space<vmem>>, vector<8x128xf32>
    tpu.vector_store %arg8[%77, %c0_35], %76 {strides = array<i32>} : memref<64x128xf32, #tpu.memory_space<vmem>>, vector<8x128xf32>,
    %c2_i32 = arith.constant 2 : i32
    %c8_i32_36 = arith.constant 8 : i32
    %79 = arith.muli %c2_i32, %c8_i32_36 : i32
    %80 = tpu.assume_multiple %79, 8 : i32
    %81 = arith.index_cast %80 : i32 to index
    %c0_37 = arith.constant 0 : index
    %82 = vector.load %arg7[%81, %c0_37] : memref<64x512xf32, #tpu.memory_space<vmem>>, vector<8x512xf32>
    %cst_38 = arith.constant dense<0.000000e+00> : vector<8x512xf32>
    %83 = tpu.matmul %76, %5, %cst_38 {dimension_numbers = #tpu.dot_dimension_numbers<[1], [0], [0], [1], [0, 0, 1, 1], [], []>} : vector<8x128xf32>, vector<128x512xf32>, vector<8x512xf32> -> vector<8x512xf32>
    %84 = arith.addf %82, %83 : vector<8x512xf32>
    %85 = math.tanh %84 : vector<8x512xf32>
    %86 = vector.extract_strided_slice %85 {offsets = [0, 0], sizes = [8, 128], strides = [1, 1]} : vector<8x512xf32> to vector<8x128xf32>
    %cst_39 = arith.constant 5.000000e-01 : f32
    %87 = vector.broadcast %cst_39 : f32 to vector<8x128xf32>
    %88 = arith.mulf %87, %86 : vector<8x128xf32>
    %cst_40 = arith.constant 5.000000e-01 : f32
    %89 = vector.broadcast %cst_40 : f32 to vector<8x128xf32>
    %90 = arith.addf %88, %89 : vector<8x128xf32>
    %91 = vector.extract_strided_slice %85 {offsets = [0, 128], sizes = [8, 128], strides = [1, 1]} : vector<8x512xf32> to vector<8x128xf32>
    %cst_41 = arith.constant 5.000000e-01 : f32
    %92 = vector.broadcast %cst_41 : f32 to vector<8x128xf32>
    %93 = arith.mulf %92, %91 : vector<8x128xf32>
    %cst_42 = arith.constant 5.000000e-01 : f32
    %94 = vector.broadcast %cst_42 : f32 to vector<8x128xf32>
    %95 = arith.addf %93, %94 : vector<8x128xf32>
    %96 = vector.extract_strided_slice %85 {offsets = [0, 256], sizes = [8, 128], strides = [1, 1]} : vector<8x512xf32> to vector<8x128xf32>
    %97 = vector.extract_strided_slice %85 {offsets = [0, 384], sizes = [8, 128], strides = [1, 1]} : vector<8x512xf32> to vector<8x128xf32>
    %cst_43 = arith.constant 5.000000e-01 : f32
    %98 = vector.broadcast %cst_43 : f32 to vector<8x128xf32>
    %99 = arith.mulf %98, %97 : vector<8x128xf32>
    %cst_44 = arith.constant 5.000000e-01 : f32
    %100 = vector.broadcast %cst_44 : f32 to vector<8x128xf32>
    %101 = arith.addf %99, %100 : vector<8x128xf32>
    %102 = arith.mulf %95, %74 : vector<8x128xf32>
    %103 = arith.mulf %90, %96 : vector<8x128xf32>
    %104 = arith.addf %102, %103 : vector<8x128xf32>
    %105 = math.tanh %104 : vector<8x128xf32>
    %106 = arith.mulf %101, %105 : vector<8x128xf32>
    %107 = arith.index_cast %80 : i32 to index
    %c0_45 = arith.constant 0 : index
    %108 = vector.load %arg8[%107, %c0_45] : memref<64x128xf32, #tpu.memory_space<vmem>>, vector<8x128xf32>
    tpu.vector_store %arg8[%107, %c0_45], %106 {strides = array<i32>} : memref<64x128xf32, #tpu.memory_space<vmem>>, vector<8x128xf32>,
    %c3_i32 = arith.constant 3 : i32
    %c8_i32_46 = arith.constant 8 : i32
    %109 = arith.muli %c3_i32, %c8_i32_46 : i32
    %110 = tpu.assume_multiple %109, 8 : i32
    %111 = arith.index_cast %110 : i32 to index
    %c0_47 = arith.constant 0 : index
    %112 = vector.load %arg7[%111, %c0_47] : memref<64x512xf32, #tpu.memory_space<vmem>>, vector<8x512xf32>
    %cst_48 = arith.constant dense<0.000000e+00> : vector<8x512xf32>
    %113 = tpu.matmul %106, %5, %cst_48 {dimension_numbers = #tpu.dot_dimension_numbers<[1], [0], [0], [1], [0, 0, 1, 1], [], []>} : vector<8x128xf32>, vector<128x512xf32>, vector<8x512xf32> -> vector<8x512xf32>
    %114 = arith.addf %112, %113 : vector<8x512xf32>
    %115 = math.tanh %114 : vector<8x512xf32>
    %116 = vector.extract_strided_slice %115 {offsets = [0, 0], sizes = [8, 128], strides = [1, 1]} : vector<8x512xf32> to vector<8x128xf32>
    %cst_49 = arith.constant 5.000000e-01 : f32
    %117 = vector.broadcast %cst_49 : f32 to vector<8x128xf32>
    %118 = arith.mulf %117, %116 : vector<8x128xf32>
    %cst_50 = arith.constant 5.000000e-01 : f32
    %119 = vector.broadcast %cst_50 : f32 to vector<8x128xf32>
    %120 = arith.addf %118, %119 : vector<8x128xf32>
    %121 = vector.extract_strided_slice %115 {offsets = [0, 128], sizes = [8, 128], strides = [1, 1]} : vector<8x512xf32> to vector<8x128xf32>
    %cst_51 = arith.constant 5.000000e-01 : f32
    %122 = vector.broadcast %cst_51 : f32 to vector<8x128xf32>
    %123 = arith.mulf %122, %121 : vector<8x128xf32>
    %cst_52 = arith.constant 5.000000e-01 : f32
    %124 = vector.broadcast %cst_52 : f32 to vector<8x128xf32>
    %125 = arith.addf %123, %124 : vector<8x128xf32>
    %126 = vector.extract_strided_slice %115 {offsets = [0, 256], sizes = [8, 128], strides = [1, 1]} : vector<8x512xf32> to vector<8x128xf32>
    %127 = vector.extract_strided_slice %115 {offsets = [0, 384], sizes = [8, 128], strides = [1, 1]} : vector<8x512xf32> to vector<8x128xf32>
    %cst_53 = arith.constant 5.000000e-01 : f32
    %128 = vector.broadcast %cst_53 : f32 to vector<8x128xf32>
    %129 = arith.mulf %128, %127 : vector<8x128xf32>
    %cst_54 = arith.constant 5.000000e-01 : f32
    %130 = vector.broadcast %cst_54 : f32 to vector<8x128xf32>
    %131 = arith.addf %129, %130 : vector<8x128xf32>
    %132 = arith.mulf %125, %104 : vector<8x128xf32>
    %133 = arith.mulf %120, %126 : vector<8x128xf32>
    %134 = arith.addf %132, %133 : vector<8x128xf32>
    %135 = math.tanh %134 : vector<8x128xf32>
    %136 = arith.mulf %131, %135 : vector<8x128xf32>
    %137 = arith.index_cast %110 : i32 to index
    %c0_55 = arith.constant 0 : index
    %138 = vector.load %arg8[%137, %c0_55] : memref<64x128xf32, #tpu.memory_space<vmem>>, vector<8x128xf32>
    tpu.vector_store %arg8[%137, %c0_55], %136 {strides = array<i32>} : memref<64x128xf32, #tpu.memory_space<vmem>>, vector<8x128xf32>,
    %c4_i32 = arith.constant 4 : i32
    %c8_i32_56 = arith.constant 8 : i32
    %139 = arith.muli %c4_i32, %c8_i32_56 : i32
    %140 = tpu.assume_multiple %139, 8 : i32
    %141 = arith.index_cast %140 : i32 to index
    %c0_57 = arith.constant 0 : index
    %142 = vector.load %arg7[%141, %c0_57] : memref<64x512xf32, #tpu.memory_space<vmem>>, vector<8x512xf32>
    %cst_58 = arith.constant dense<0.000000e+00> : vector<8x512xf32>
    %143 = tpu.matmul %136, %5, %cst_58 {dimension_numbers = #tpu.dot_dimension_numbers<[1], [0], [0], [1], [0, 0, 1, 1], [], []>} : vector<8x128xf32>, vector<128x512xf32>, vector<8x512xf32> -> vector<8x512xf32>
    %144 = arith.addf %142, %143 : vector<8x512xf32>
    %145 = math.tanh %144 : vector<8x512xf32>
    %146 = vector.extract_strided_slice %145 {offsets = [0, 0], sizes = [8, 128], strides = [1, 1]} : vector<8x512xf32> to vector<8x128xf32>
    %cst_59 = arith.constant 5.000000e-01 : f32
    %147 = vector.broadcast %cst_59 : f32 to vector<8x128xf32>
    %148 = arith.mulf %147, %146 : vector<8x128xf32>
    %cst_60 = arith.constant 5.000000e-01 : f32
    %149 = vector.broadcast %cst_60 : f32 to vector<8x128xf32>
    %150 = arith.addf %148, %149 : vector<8x128xf32>
    %151 = vector.extract_strided_slice %145 {offsets = [0, 128], sizes = [8, 128], strides = [1, 1]} : vector<8x512xf32> to vector<8x128xf32>
    %cst_61 = arith.constant 5.000000e-01 : f32
    %152 = vector.broadcast %cst_61 : f32 to vector<8x128xf32>
    %153 = arith.mulf %152, %151 : vector<8x128xf32>
    %cst_62 = arith.constant 5.000000e-01 : f32
    %154 = vector.broadcast %cst_62 : f32 to vector<8x128xf32>
    %155 = arith.addf %153, %154 : vector<8x128xf32>
    %156 = vector.extract_strided_slice %145 {offsets = [0, 256], sizes = [8, 128], strides = [1, 1]} : vector<8x512xf32> to vector<8x128xf32>
    %157 = vector.extract_strided_slice %145 {offsets = [0, 384], sizes = [8, 128], strides = [1, 1]} : vector<8x512xf32> to vector<8x128xf32>
    %cst_63 = arith.constant 5.000000e-01 : f32
    %158 = vector.broadcast %cst_63 : f32 to vector<8x128xf32>
    %159 = arith.mulf %158, %157 : vector<8x128xf32>
    %cst_64 = arith.constant 5.000000e-01 : f32
    %160 = vector.broadcast %cst_64 : f32 to vector<8x128xf32>
    %161 = arith.addf %159, %160 : vector<8x128xf32>
    %162 = arith.mulf %155, %134 : vector<8x128xf32>
    %163 = arith.mulf %150, %156 : vector<8x128xf32>
    %164 = arith.addf %162, %163 : vector<8x128xf32>
    %165 = math.tanh %164 : vector<8x128xf32>
    %166 = arith.mulf %161, %165 : vector<8x128xf32>
    %167 = arith.index_cast %140 : i32 to index
    %c0_65 = arith.constant 0 : index
    %168 = vector.load %arg8[%167, %c0_65] : memref<64x128xf32, #tpu.memory_space<vmem>>, vector<8x128xf32>
    tpu.vector_store %arg8[%167, %c0_65], %166 {strides = array<i32>} : memref<64x128xf32, #tpu.memory_space<vmem>>, vector<8x128xf32>,
    %c5_i32 = arith.constant 5 : i32
    %c8_i32_66 = arith.constant 8 : i32
    %169 = arith.muli %c5_i32, %c8_i32_66 : i32
    %170 = tpu.assume_multiple %169, 8 : i32
    %171 = arith.index_cast %170 : i32 to index
    %c0_67 = arith.constant 0 : index
    %172 = vector.load %arg7[%171, %c0_67] : memref<64x512xf32, #tpu.memory_space<vmem>>, vector<8x512xf32>
    %cst_68 = arith.constant dense<0.000000e+00> : vector<8x512xf32>
    %173 = tpu.matmul %166, %5, %cst_68 {dimension_numbers = #tpu.dot_dimension_numbers<[1], [0], [0], [1], [0, 0, 1, 1], [], []>} : vector<8x128xf32>, vector<128x512xf32>, vector<8x512xf32> -> vector<8x512xf32>
    %174 = arith.addf %172, %173 : vector<8x512xf32>
    %175 = math.tanh %174 : vector<8x512xf32>
    %176 = vector.extract_strided_slice %175 {offsets = [0, 0], sizes = [8, 128], strides = [1, 1]} : vector<8x512xf32> to vector<8x128xf32>
    %cst_69 = arith.constant 5.000000e-01 : f32
    %177 = vector.broadcast %cst_69 : f32 to vector<8x128xf32>
    %178 = arith.mulf %177, %176 : vector<8x128xf32>
    %cst_70 = arith.constant 5.000000e-01 : f32
    %179 = vector.broadcast %cst_70 : f32 to vector<8x128xf32>
    %180 = arith.addf %178, %179 : vector<8x128xf32>
    %181 = vector.extract_strided_slice %175 {offsets = [0, 128], sizes = [8, 128], strides = [1, 1]} : vector<8x512xf32> to vector<8x128xf32>
    %cst_71 = arith.constant 5.000000e-01 : f32
    %182 = vector.broadcast %cst_71 : f32 to vector<8x128xf32>
    %183 = arith.mulf %182, %181 : vector<8x128xf32>
    %cst_72 = arith.constant 5.000000e-01 : f32
    %184 = vector.broadcast %cst_72 : f32 to vector<8x128xf32>
    %185 = arith.addf %183, %184 : vector<8x128xf32>
    %186 = vector.extract_strided_slice %175 {offsets = [0, 256], sizes = [8, 128], strides = [1, 1]} : vector<8x512xf32> to vector<8x128xf32>
    %187 = vector.extract_strided_slice %175 {offsets = [0, 384], sizes = [8, 128], strides = [1, 1]} : vector<8x512xf32> to vector<8x128xf32>
    %cst_73 = arith.constant 5.000000e-01 : f32
    %188 = vector.broadcast %cst_73 : f32 to vector<8x128xf32>
    %189 = arith.mulf %188, %187 : vector<8x128xf32>
    %cst_74 = arith.constant 5.000000e-01 : f32
    %190 = vector.broadcast %cst_74 : f32 to vector<8x128xf32>
    %191 = arith.addf %189, %190 : vector<8x128xf32>
    %192 = arith.mulf %185, %164 : vector<8x128xf32>
    %193 = arith.mulf %180, %186 : vector<8x128xf32>
    %194 = arith.addf %192, %193 : vector<8x128xf32>
    %195 = math.tanh %194 : vector<8x128xf32>
    %196 = arith.mulf %191, %195 : vector<8x128xf32>
    %197 = arith.index_cast %170 : i32 to index
    %c0_75 = arith.constant 0 : index
    %198 = vector.load %arg8[%197, %c0_75] : memref<64x128xf32, #tpu.memory_space<vmem>>, vector<8x128xf32>
    tpu.vector_store %arg8[%197, %c0_75], %196 {strides = array<i32>} : memref<64x128xf32, #tpu.memory_space<vmem>>, vector<8x128xf32>,
    %c6_i32 = arith.constant 6 : i32
    %c8_i32_76 = arith.constant 8 : i32
    %199 = arith.muli %c6_i32, %c8_i32_76 : i32
    %200 = tpu.assume_multiple %199, 8 : i32
    %201 = arith.index_cast %200 : i32 to index
    %c0_77 = arith.constant 0 : index
    %202 = vector.load %arg7[%201, %c0_77] : memref<64x512xf32, #tpu.memory_space<vmem>>, vector<8x512xf32>
    %cst_78 = arith.constant dense<0.000000e+00> : vector<8x512xf32>
    %203 = tpu.matmul %196, %5, %cst_78 {dimension_numbers = #tpu.dot_dimension_numbers<[1], [0], [0], [1], [0, 0, 1, 1], [], []>} : vector<8x128xf32>, vector<128x512xf32>, vector<8x512xf32> -> vector<8x512xf32>
    %204 = arith.addf %202, %203 : vector<8x512xf32>
    %205 = math.tanh %204 : vector<8x512xf32>
    %206 = vector.extract_strided_slice %205 {offsets = [0, 0], sizes = [8, 128], strides = [1, 1]} : vector<8x512xf32> to vector<8x128xf32>
    %cst_79 = arith.constant 5.000000e-01 : f32
    %207 = vector.broadcast %cst_79 : f32 to vector<8x128xf32>
    %208 = arith.mulf %207, %206 : vector<8x128xf32>
    %cst_80 = arith.constant 5.000000e-01 : f32
    %209 = vector.broadcast %cst_80 : f32 to vector<8x128xf32>
    %210 = arith.addf %208, %209 : vector<8x128xf32>
    %211 = vector.extract_strided_slice %205 {offsets = [0, 128], sizes = [8, 128], strides = [1, 1]} : vector<8x512xf32> to vector<8x128xf32>
    %cst_81 = arith.constant 5.000000e-01 : f32
    %212 = vector.broadcast %cst_81 : f32 to vector<8x128xf32>
    %213 = arith.mulf %212, %211 : vector<8x128xf32>
    %cst_82 = arith.constant 5.000000e-01 : f32
    %214 = vector.broadcast %cst_82 : f32 to vector<8x128xf32>
    %215 = arith.addf %213, %214 : vector<8x128xf32>
    %216 = vector.extract_strided_slice %205 {offsets = [0, 256], sizes = [8, 128], strides = [1, 1]} : vector<8x512xf32> to vector<8x128xf32>
    %217 = vector.extract_strided_slice %205 {offsets = [0, 384], sizes = [8, 128], strides = [1, 1]} : vector<8x512xf32> to vector<8x128xf32>
    %cst_83 = arith.constant 5.000000e-01 : f32
    %218 = vector.broadcast %cst_83 : f32 to vector<8x128xf32>
    %219 = arith.mulf %218, %217 : vector<8x128xf32>
    %cst_84 = arith.constant 5.000000e-01 : f32
    %220 = vector.broadcast %cst_84 : f32 to vector<8x128xf32>
    %221 = arith.addf %219, %220 : vector<8x128xf32>
    %222 = arith.mulf %215, %194 : vector<8x128xf32>
    %223 = arith.mulf %210, %216 : vector<8x128xf32>
    %224 = arith.addf %222, %223 : vector<8x128xf32>
    %225 = math.tanh %224 : vector<8x128xf32>
    %226 = arith.mulf %221, %225 : vector<8x128xf32>
    %227 = arith.index_cast %200 : i32 to index
    %c0_85 = arith.constant 0 : index
    %228 = vector.load %arg8[%227, %c0_85] : memref<64x128xf32, #tpu.memory_space<vmem>>, vector<8x128xf32>
    tpu.vector_store %arg8[%227, %c0_85], %226 {strides = array<i32>} : memref<64x128xf32, #tpu.memory_space<vmem>>, vector<8x128xf32>,
    %c7_i32 = arith.constant 7 : i32
    %c8_i32_86 = arith.constant 8 : i32
    %229 = arith.muli %c7_i32, %c8_i32_86 : i32
    %230 = tpu.assume_multiple %229, 8 : i32
    %231 = arith.index_cast %230 : i32 to index
    %c0_87 = arith.constant 0 : index
    %232 = vector.load %arg7[%231, %c0_87] : memref<64x512xf32, #tpu.memory_space<vmem>>, vector<8x512xf32>
    %cst_88 = arith.constant dense<0.000000e+00> : vector<8x512xf32>
    %233 = tpu.matmul %226, %5, %cst_88 {dimension_numbers = #tpu.dot_dimension_numbers<[1], [0], [0], [1], [0, 0, 1, 1], [], []>} : vector<8x128xf32>, vector<128x512xf32>, vector<8x512xf32> -> vector<8x512xf32>
    %234 = arith.addf %232, %233 : vector<8x512xf32>
    %235 = math.tanh %234 : vector<8x512xf32>
    %236 = vector.extract_strided_slice %235 {offsets = [0, 0], sizes = [8, 128], strides = [1, 1]} : vector<8x512xf32> to vector<8x128xf32>
    %cst_89 = arith.constant 5.000000e-01 : f32
    %237 = vector.broadcast %cst_89 : f32 to vector<8x128xf32>
    %238 = arith.mulf %237, %236 : vector<8x128xf32>
    %cst_90 = arith.constant 5.000000e-01 : f32
    %239 = vector.broadcast %cst_90 : f32 to vector<8x128xf32>
    %240 = arith.addf %238, %239 : vector<8x128xf32>
    %241 = vector.extract_strided_slice %235 {offsets = [0, 128], sizes = [8, 128], strides = [1, 1]} : vector<8x512xf32> to vector<8x128xf32>
    %cst_91 = arith.constant 5.000000e-01 : f32
    %242 = vector.broadcast %cst_91 : f32 to vector<8x128xf32>
    %243 = arith.mulf %242, %241 : vector<8x128xf32>
    %cst_92 = arith.constant 5.000000e-01 : f32
    %244 = vector.broadcast %cst_92 : f32 to vector<8x128xf32>
    %245 = arith.addf %243, %244 : vector<8x128xf32>
    %246 = vector.extract_strided_slice %235 {offsets = [0, 256], sizes = [8, 128], strides = [1, 1]} : vector<8x512xf32> to vector<8x128xf32>
    %247 = vector.extract_strided_slice %235 {offsets = [0, 384], sizes = [8, 128], strides = [1, 1]} : vector<8x512xf32> to vector<8x128xf32>
    %cst_93 = arith.constant 5.000000e-01 : f32
    %248 = vector.broadcast %cst_93 : f32 to vector<8x128xf32>
    %249 = arith.mulf %248, %247 : vector<8x128xf32>
    %cst_94 = arith.constant 5.000000e-01 : f32
    %250 = vector.broadcast %cst_94 : f32 to vector<8x128xf32>
    %251 = arith.addf %249, %250 : vector<8x128xf32>
    %252 = arith.mulf %245, %224 : vector<8x128xf32>
    %253 = arith.mulf %240, %246 : vector<8x128xf32>
    %254 = arith.addf %252, %253 : vector<8x128xf32>
    %255 = math.tanh %254 : vector<8x128xf32>
    %256 = arith.mulf %251, %255 : vector<8x128xf32>
    %257 = arith.index_cast %230 : i32 to index
    %c0_95 = arith.constant 0 : index
    %258 = vector.load %arg8[%257, %c0_95] : memref<64x128xf32, #tpu.memory_space<vmem>>, vector<8x128xf32>
    tpu.vector_store %arg8[%257, %c0_95], %256 {strides = array<i32>} : memref<64x128xf32, #tpu.memory_space<vmem>>, vector<8x128xf32>,
    %c8_i32_96 = arith.constant 8 : i32
    %c0_97 = arith.constant 0 : index
    %c0_98 = arith.constant 0 : index
    %259 = vector.load %arg5[%c0_97, %c0_98] : memref<8x128xf32, #tpu.memory_space<vmem>>, vector<8x128xf32>
    tpu.vector_store %arg5[%c0_97, %c0_98], %256 {strides = array<i32>} : memref<8x128xf32, #tpu.memory_space<vmem>>, vector<8x128xf32>,
    %c0_99 = arith.constant 0 : index
    %c0_100 = arith.constant 0 : index
    %260 = vector.load %arg6[%c0_99, %c0_100] : memref<8x128xf32, #tpu.memory_space<vmem>>, vector<8x128xf32>
    tpu.vector_store %arg6[%c0_99, %c0_100], %254 {strides = array<i32>} : memref<8x128xf32, #tpu.memory_space<vmem>>, vector<8x128xf32>,
    %c0_101 = arith.constant 0 : index
    %c0_102 = arith.constant 0 : index
    %261 = vector.load %arg8[%c0_101, %c0_102] : memref<64x128xf32, #tpu.memory_space<vmem>>, vector<64x128xf32>
    %cst_103 = arith.constant dense<0.000000e+00> : vector<64x128xf32>
    %262 = tpu.matmul %261, %6, %cst_103 {dimension_numbers = #tpu.dot_dimension_numbers<[1], [0], [0], [1], [0, 0, 1, 1], [], []>} : vector<64x128xf32>, vector<128x128xf32>, vector<64x128xf32> -> vector<64x128xf32>
    %263 = vector.broadcast %2 : vector<1x128xf32> to vector<64x128xf32>
    %264 = arith.addf %262, %263 : vector<64x128xf32>
    %c0_104 = arith.constant 0 : index
    %c0_105 = arith.constant 0 : index
    %265 = vector.load %arg4[%c0_104, %c0_105] : memref<64x128xf32, #tpu.memory_space<vmem>>, vector<64x128xf32>
    tpu.vector_store %arg4[%c0_104, %c0_105], %264 {strides = array<i32>} : memref<64x128xf32, #tpu.memory_space<vmem>>, vector<64x128xf32>,
    return
  }
}

</mosaic_0001>

<llo_original>
// kernel: squeeze.5
$region0: #{squeeze.5}
  %s0 = inlined_call_operand.vmem [shape: f32[64], index: 0, kind: input, shape index: {}]
  %s1 = inlined_call_operand.vmem [shape: f32[8,8], index: 1, kind: output, shape index: {}]
  $region1: #{squeeze.5} parent=0
    #allocation0 [shape = 'u8[4096]{0}', space=vmem, size = 0x1000, scoped, tag = 'scoped mem for input reshape']
    %s3 = sshll.u32 1, 1
    %s4 = ssub.s32 %s3, 1
    %v5 = vld [vmem:[%s0] sm:%s4]
    %6 = vst [vmem:[#allocation0] sm:%s4] %v5
    %v7 = vld [vmem:[#allocation0] sm:$0x1]
    %vm8 = vcmask 64512
    %9 = vst.msk [vmem:[%s1] sm:$0x1] %vm8, %v7
    %v10 = vld [vmem:[#allocation0] sm:$0x1]
    %11 = vrot.lane.b32.xlu0 %v10, 120
    %v12 = vpop.permute.xlu0 %11
    %vm13 = vcmask 64512
    %s14 = scalar_lea.vmem %s1, 1
    %15 = vst.msk [vmem:[%s14] sm:$0x1] %vm13, %v12
    %v16 = vld [vmem:[#allocation0] sm:$0x1]
    %17 = vrot.lane.b32.xlu0 %v16, 112
    %v18 = vpop.permute.xlu0 %17
    %vm19 = vcmask 64512
    %s20 = scalar_lea.vmem %s1, 2
    %21 = vst.msk [vmem:[%s20] sm:$0x1] %vm19, %v18
    %v22 = vld [vmem:[#allocation0] sm:$0x1]
    %23 = vrot.lane.b32.xlu0 %v22, 104
    %v24 = vpop.permute.xlu0 %23
    %vm25 = vcmask 64512
    %s26 = scalar_lea.vmem %s1, 3
    %27 = vst.msk [vmem:[%s26] sm:$0x1] %vm25, %v24
    %v28 = vld [vmem:[#allocation0] sm:$0x1]
    %29 = vrot.lane.b32.xlu0 %v28, 96
    %v30 = vpop.permute.xlu0 %29
    %vm31 = vcmask 64512
    %s32 = scalar_lea.vmem %s1, 4
    %33 = vst.msk [vmem:[%s32] sm:$0x1] %vm31, %v30
    %v34 = vld [vmem:[#allocation0] sm:$0x1]
    %35 = vrot.lane.b32.xlu0 %v34, 88
    %v36 = vpop.permute.xlu0 %35
    %vm37 = vcmask 64512
    %s38 = scalar_lea.vmem %s1, 5
    %39 = vst.msk [vmem:[%s38] sm:$0x1] %vm37, %v36
    %v40 = vld [vmem:[#allocation0] sm:$0x1]
    %41 = vrot.lane.b32.xlu0 %v40, 80
    %v42 = vpop.permute.xlu0 %41
    %vm43 = vcmask 64512
    %s44 = scalar_lea.vmem %s1, 6
    %45 = vst.msk [vmem:[%s44] sm:$0x1] %vm43, %v42
    %v46 = vld [vmem:[#allocation0] sm:$0x1]
    %47 = vrot.lane.b32.xlu0 %v46, 72
    %v48 = vpop.permute.xlu0 %47
    %vm49 = vcmask 64512
    %s50 = scalar_lea.vmem %s1, 7
    %51 = vst.msk [vmem:[%s50] sm:$0x1] %vm49, %v48

// kernel: critic_forward.1
$region0: #{critic_forward.1}
  #allocation0 [shape = 'u32[]', space=smem, size = 0x4, offset = 0x4, fixed_abs, tag = 'smem constant byte address 0x4 - core index']
  #allocation1 [shape = 'u32[144,128]{1,0:T(1,128)}', space=vmem, size = 0x12000, scoped, tag = 'internal scratch']
  #allocation2 [shape = 'f32[64,512]{1,0:T(8,128)}', space=vmem, size = 0x20000, scoped, tag = 'scratch operand']
  #allocation3 [shape = 'f32[64,128]{1,0:T(8,128)}', space=vmem, size = 0x8000, scoped, tag = 'scratch operand']
  %s0 = inlined_call_operand.vmem [shape: f32[64,8], index: 0, kind: input, shape index: {}]
  %s1 = inlined_call_operand.vmem [shape: f32[8,128], index: 1, kind: input, shape index: {}]
  %s2 = inlined_call_operand.vmem [shape: f32[8,128], index: 2, kind: input, shape index: {}]
  %s3 = inlined_call_operand.hbm [shape: f32[400,512], index: 3, kind: input, shape index: {}]
  %s4 = inlined_call_operand.vmem [shape: f32[64,128], index: 4, kind: output, shape index: {0}]
  %s5 = inlined_call_operand.vmem [shape: f32[8,128], index: 5, kind: output, shape index: {1}]
  %s6 = inlined_call_operand.vmem [shape: f32[8,128], index: 6, kind: output, shape index: {2}]
  %7 = xla_tuple %s4, %s5, %s6
  %s8 = sld [smem:[#allocation0]]
  $region46: #{critic_forward.1} parent=0
    _
  %s10 = ssub.s32 1, %s8
  %s11 = scalar_select 0, %s10, %s8
  $region1: #{critic_forward.1} parent=0
    #allocation4 [shape = 'u8[819200]{0}', space=vmem, size = 0xc8000, scoped, tag = 'input window, operand 3, single buffered']
    #allocation5 [shape = 's32[1]{0}', space=sflag, size = 0x4, scoped, tag = 'scoped memory for critic_forward.1']
    %12 = vsyncpa [#allocation5], 0
    // Predicated region
    $region2: #{critic_forward.1} parent=1 // pred_check
      _
    $region3: #{critic_forward.1} parent=1 // pred_check_branch
      %14 = sbr.rel (0) target = $region5
    $region4: #{critic_forward.1} parent=1 // pred_region
      _
    $region5: #{critic_forward.1} parent=1 // pred_fallthru
      _
    // Predicated region
    $region6: #{critic_forward.1} parent=1 // pred_check
      _
    $region7: #{critic_forward.1} parent=1 // pred_check_branch
      %16 = sbr.rel (0) target = $region9
    $region8: #{critic_forward.1} parent=1 // pred_region
      _
    $region9: #{critic_forward.1} parent=1 // pred_fallthru
      _
    // Predicated region
    $region10: #{critic_forward.1} parent=1 // pred_check
      _
    $region11: #{critic_forward.1} parent=1 // pred_check_branch
      %18 = sbr.rel (0) target = $region13
    $region12: #{critic_forward.1} parent=1 // pred_region
      _
    $region13: #{critic_forward.1} parent=1 // pred_fallthru
      _
    // Predicated region
    $region14: #{critic_forward.1} parent=1 // pred_check
      _
    $region15: #{critic_forward.1} parent=1 // pred_check_branch
      %20 = sbr.rel (0) target = $region17
    $region16: #{critic_forward.1} parent=1 // pred_region
      %s22 = ssub.s32 25600, 25600
      %23 = vsyncadd [#allocation5], %s22
      %s24 = sshll.u32 [#allocation4], 4
      %s25 = int_to_ptr.vmem [resolvable:$true] %s24
      %30 = dma.hbm_to_vmem [thread:$0]  %s3, 25600, %s25, [#allocation5], 512, 512, 32
    $region17: #{critic_forward.1} parent=1 // pred_fallthru
      _
    // Predicated region
    $region18: #{critic_forward.1} parent=1 // pred_check
      _
    $region19: #{critic_forward.1} parent=1 // pred_check_branch
      %32 = sbr.rel (0) target = $region21
    $region20: #{critic_forward.1} parent=1 // pred_region
      %33 = dma.done [#allocation5], 25600
    $region21: #{critic_forward.1} parent=1 // pred_fallthru
      _
    %v34 = vld [vmem:[#allocation4] ss:$0 sm:$0xff]
    %s35 = scalar_lea.vmem [#allocation4], 1
    %v36 = vld [vmem:[%s35] ss:$8 sm:$0xf]
    %v37 = vld [vmem:[#allocation4 + $0x2] ss:$0 sm:$0xff]
    %v38 = vld [vmem:[#allocation4 + $0x20] sm:$0xff]
    %v39 = vld [vmem:[#allocation4 + $0x40] sm:$0xff]
    %v40 = vld [vmem:[#allocation4 + $0x48] sm:$0xff]
    %v41 = vld [vmem:[#allocation4 + $0x50] sm:$0xff]
    %v42 = vld [vmem:[#allocation4 + $0x58] sm:$0xff]
    %v43 = vld [vmem:[#allocation4 + $0x60] sm:$0xff]
    %v44 = vld [vmem:[#allocation4 + $0x68] sm:$0xff]
    %v45 = vld [vmem:[#allocation4 + $0x70] sm:$0xff]
    %v46 = vld [vmem:[#allocation4 + $0x78] sm:$0xff]
    %v47 = vld [vmem:[#allocation4 + $0x80] sm:$0xff]
    %v48 = vld [vmem:[#allocation4 + $0x88] sm:$0xff]
    %v49 = vld [vmem:[#allocation4 + $0x90] sm:$0xff]
    %v50 = vld [vmem:[#allocation4 + $0x98] sm:$0xff]
    %v51 = vld [vmem:[#allocation4 + $0xa0] sm:$0xff]
    %v52 = vld [vmem:[#allocation4 + $0xa8] sm:$0xff]
    %v53 = vld [vmem:[#allocation4 + $0xb0] sm:$0xff]
    %v54 = vld [vmem:[#allocation4 + $0xb8] sm:$0xff]
    %v55 = vld [vmem:[#allocation4 + $0xc0] sm:$0xff]
    %v56 = vld [vmem:[#allocation4 + $0xc8] sm:$0xff]
    %v57 = vld [vmem:[#allocation4 + $0xd0] sm:$0xff]
    %v58 = vld [vmem:[#allocation4 + $0xd8] sm:$0xff]
    %v59 = vld [vmem:[#allocation4 + $0xe0] sm:$0xff]
    %v60 = vld [vmem:[#allocation4 + $0xe8] sm:$0xff]
    %v61 = vld [vmem:[#allocation4 + $0xf0] sm:$0xff]
    %v62 = vld [vmem:[#allocation4 + $0xf8] sm:$0xff]
    %v63 = vld [vmem:[#allocation4 + $0x100] sm:$0xff]
    %v64 = vld [vmem:[#allocation4 + $0x108] sm:$0xff]
    %v65 = vld [vmem:[#allocation4 + $0x110] sm:$0xff]
    %v66 = vld [vmem:[#allocation4 + $0x118] sm:$0xff]
    %v67 = vld [vmem:[#allocation4 + $0x120] sm:$0xff]
    %v68 = vld [vmem:[#allocation4 + $0x128] sm:$0xff]
    %v69 = vld [vmem:[#allocation4 + $0x130] sm:$0xff]
    %v70 = vld [vmem:[#allocation4 + $0x138] sm:$0xff]
    %v71 = vld [vmem:[#allocation4 + $0x140] sm:$0xff]
    %v72 = vld [vmem:[#allocation4 + $0x148] sm:$0xff]
    %v73 = vld [vmem:[#allocation4 + $0x150] sm:$0xff]
    %v74 = vld [vmem:[#allocation4 + $0x158] sm:$0xff]
    %v75 = vld [vmem:[#allocation4 + $0x160] sm:$0xff]
    %v76 = vld [vmem:[#allocation4 + $0x168] sm:$0xff]
    %v77 = vld [vmem:[#allocation4 + $0x170] sm:$0xff]
    %v78 = vld [vmem:[#allocation4 + $0x178] sm:$0xff]
    %v79 = vld [vmem:[#allocation4 + $0x180] sm:$0xff]
    %v80 = vld [vmem:[#allocation4 + $0x188] sm:$0xff]
    %v81 = vld [vmem:[#allocation4 + $0x190] sm:$0xff]
    %v82 = vld [vmem:[#allocation4 + $0x198] sm:$0xff]
    %v83 = vld [vmem:[#allocation4 + $0x1a0] sm:$0xff]
    %v84 = vld [vmem:[#allocation4 + $0x1a8] sm:$0xff]
    %v85 = vld [vmem:[#allocation4 + $0x1b0] sm:$0xff]
    %v86 = vld [vmem:[#allocation4 + $0x1b8] sm:$0xff]
    %v87 = vld [vmem:[#allocation4 + $0x1c0] sm:$0xff]
    %v88 = vld [vmem:[#allocation4 + $0x1c8] sm:$0xff]
    %v89 = vld [vmem:[#allocation4 + $0x1d0] sm:$0xff]
    %v90 = vld [vmem:[#allocation4 + $0x1d8] sm:$0xff]
    %v91 = vld [vmem:[#allocation4 + $0x1e0] sm:$0xff]
    %v92 = vld [vmem:[#allocation4 + $0x1e8] sm:$0xff]
    %v93 = vld [vmem:[#allocation4 + $0x1f0] sm:$0xff]
    %v94 = vld [vmem:[#allocation4 + $0x1f8] sm:$0xff]
    %v95 = vld [vmem:[#allocation4 + $0x200] sm:$0xff]
    %v96 = vld [vmem:[#allocation4 + $0x208] sm:$0xff]
    %v97 = vld [vmem:[#allocation4 + $0x210] sm:$0xff]
    %v98 = vld [vmem:[#allocation4 + $0x218] sm:$0xff]
    %v99 = vld [vmem:[#allocation4 + $0x220] sm:$0xff]
    %v100 = vld [vmem:[#allocation4 + $0x228] sm:$0xff]
    %v101 = vld [vmem:[#allocation4 + $0x230] sm:$0xff]
    %v102 = vld [vmem:[#allocation4 + $0x238] sm:$0xff]
    %v103 = vld [vmem:[#allocation4 + $0x240] sm:$0xff]
    %v104 = vld [vmem:[#allocation4 + $0x248] sm:$0xff]
    %v105 = vld [vmem:[#allocation4 + $0x250] sm:$0xff]
    %v106 = vld [vmem:[#allocation4 + $0x258] sm:$0xff]
    %v107 = vld [vmem:[#allocation4 + $0x260] sm:$0xff]
    %v108 = vld [vmem:[#allocation4 + $0x268] sm:$0xff]
    %v109 = vld [vmem:[#allocation4 + $0x270] sm:$0xff]
    %v110 = vld [vmem:[#allocation4 + $0x278] sm:$0xff]
    %v111 = vld [vmem:[#allocation4 + $0x280] sm:$0xff]
    %v112 = vld [vmem:[#allocation4 + $0x288] sm:$0xff]
    %v113 = vld [vmem:[#allocation4 + $0x290] sm:$0xff]
    %v114 = vld [vmem:[#allocation4 + $0x298] sm:$0xff]
    %v115 = vld [vmem:[#allocation4 + $0x2a0] sm:$0xff]
    %v116 = vld [vmem:[#allocation4 + $0x2a8] sm:$0xff]
    %v117 = vld [vmem:[#allocation4 + $0x2b0] sm:$0xff]
    %v118 = vld [vmem:[#allocation4 + $0x2b8] sm:$0xff]
    %v119 = vld [vmem:[#allocation4 + $0x2c0] sm:$0xff]
    %v120 = vld [vmem:[#allocation4 + $0x2c8] sm:$0xff]
    %v121 = vld [vmem:[#allocation4 + $0x2d0] sm:$0xff]
    %v122 = vld [vmem:[#allocation4 + $0x2d8] sm:$0xff]
    %v123 = vld [vmem:[#allocation4 + $0x2e0] sm:$0xff]
    %v124 = vld [vmem:[#allocation4 + $0x2e8] sm:$0xff]
    %v125 = vld [vmem:[#allocation4 + $0x2f0] sm:$0xff]
    %v126 = vld [vmem:[#allocation4 + $0x2f8] sm:$0xff]
    %v127 = vld [vmem:[#allocation4 + $0x300] sm:$0xff]
    %v128 = vld [vmem:[#allocation4 + $0x308] sm:$0xff]
    %v129 = vld [vmem:[#allocation4 + $0x310] sm:$0xff]
    %v130 = vld [vmem:[#allocation4 + $0x318] sm:$0xff]
    %v131 = vld [vmem:[#allocation4 + $0x320] sm:$0xff]
    %v132 = vld [vmem:[#allocation4 + $0x328] sm:$0xff]
    %v133 = vld [vmem:[#allocation4 + $0x330] sm:$0xff]
    %v134 = vld [vmem:[#allocation4 + $0x338] sm:$0xff]
    %v135 = vld [vmem:[#allocation4 + $0x340] sm:$0xff]
    %v136 = vld [vmem:[#allocation4 + $0x348] sm:$0xff]
    %v137 = vld [vmem:[#allocation4 + $0x350] sm:$0xff]
    %v138 = vld [vmem:[#allocation4 + $0x358] sm:$0xff]
    %v139 = vld [vmem:[#allocation4 + $0x360] sm:$0xff]
    %v140 = vld [vmem:[#allocation4 + $0x368] sm:$0xff]
    %v141 = vld [vmem:[#allocation4 + $0x370] sm:$0xff]
    %v142 = vld [vmem:[#allocation4 + $0x378] sm:$0xff]
    %v143 = vld [vmem:[#allocation4 + $0x380] sm:$0xff]
    %v144 = vld [vmem:[#allocation4 + $0x388] sm:$0xff]
    %v145 = vld [vmem:[#allocation4 + $0x390] sm:$0xff]
    %v146 = vld [vmem:[#allocation4 + $0x398] sm:$0xff]
    %v147 = vld [vmem:[#allocation4 + $0x3a0] sm:$0xff]
    %v148 = vld [vmem:[#allocation4 + $0x3a8] sm:$0xff]
    %v149 = vld [vmem:[#allocation4 + $0x3b0] sm:$0xff]
    %v150 = vld [vmem:[#allocation4 + $0x3b8] sm:$0xff]
    %v151 = vld [vmem:[#allocation4 + $0x3c0] sm:$0xff]
    %v152 = vld [vmem:[#allocation4 + $0x3c8] sm:$0xff]
    %v153 = vld [vmem:[#allocation4 + $0x3d0] sm:$0xff]
    %v154 = vld [vmem:[#allocation4 + $0x3d8] sm:$0xff]
    %v155 = vld [vmem:[#allocation4 + $0x3e0] sm:$0xff]
    %v156 = vld [vmem:[#allocation4 + $0x3e8] sm:$0xff]
    %v157 = vld [vmem:[#allocation4 + $0x3f0] sm:$0xff]
    %v158 = vld [vmem:[#allocation4 + $0x3f8] sm:$0xff]
    %v159 = vld [vmem:[#allocation4 + $0x400] sm:$0xff]
    %v160 = vld [vmem:[#allocation4 + $0x408] sm:$0xff]
    %v161 = vld [vmem:[#allocation4 + $0x410] sm:$0xff]
    %v162 = vld [vmem:[#allocation4 + $0x418] sm:$0xff]
    %v163 = vld [vmem:[#allocation4 + $0x420] sm:$0xff]
    %v164 = vld [vmem:[#allocation4 + $0x428] sm:$0xff]
    %v165 = vld [vmem:[#allocation4 + $0x430] sm:$0xff]
    %v166 = vld [vmem:[#allocation4 + $0x438] sm:$0xff]
    %v167 = vld [vmem:[#allocation4 + $0x440] sm:$0xff]
    %v168 = vld [vmem:[#allocation4 + $0x460] sm:$0xff]
    %v169 = vld [vmem:[#allocation4 + $0x480] sm:$0xff]
    %v170 = vld [vmem:[#allocation4 + $0x4a0] sm:$0xff]
    %v171 = vld [vmem:[#allocation4 + $0x4c0] sm:$0xff]
    %v172 = vld [vmem:[#allocation4 + $0x4e0] sm:$0xff]
    %v173 = vld [vmem:[#allocation4 + $0x500] sm:$0xff]
    %v174 = vld [vmem:[#allocation4 + $0x520] sm:$0xff]
    %v175 = vld [vmem:[#allocation4 + $0x540] sm:$0xff]
    %v176 = vld [vmem:[#allocation4 + $0x560] sm:$0xff]
    %v177 = vld [vmem:[#allocation4 + $0x580] sm:$0xff]
    %v178 = vld [vmem:[#allocation4 + $0x5a0] sm:$0xff]
    %v179 = vld [vmem:[#allocation4 + $0x5c0] sm:$0xff]
    %v180 = vld [vmem:[#allocation4 + $0x5e0] sm:$0xff]
    %v181 = vld [vmem:[#allocation4 + $0x600] sm:$0xff]
    %v182 = vld [vmem:[#allocation4 + $0x620] sm:$0xff]
    %v183 = vld [vmem:[%s0] sm:$0xff]
    %v184 = vld [vmem:[%s0 + $0x8] sm:$0xff]
    %v185 = vld [vmem:[%s0 + $0x10] sm:$0xff]
    %v186 = vld [vmem:[%s0 + $0x18] sm:$0xff]
    %v187 = vld [vmem:[%s0 + $0x20] sm:$0xff]
    %v188 = vld [vmem:[%s0 + $0x28] sm:$0xff]
    %v189 = vld [vmem:[%s0 + $0x30] sm:$0xff]
    %v190 = vld [vmem:[%s0 + $0x38] sm:$0xff]
    %vm191 = vcmask 64512
    %v193 = vsel %vm191, %v183, 0
    %v196 = vsel %vm191, %v184, 0
    %v199 = vsel %vm191, %v185, 0
    %v202 = vsel %vm191, %v186, 0
    %v205 = vsel %vm191, %v187, 0
    %v208 = vsel %vm191, %v188, 0
    %v211 = vsel %vm191, %v189, 0
    %v214 = vsel %vm191, %v190, 0
    %216 = vmatprep.subr.mxu0 0.0
    %217 = vmatpush1.msra.mxu0 0.0
    %218 = vmatprep.subr.mxu0 0.0
    %219 = vmatpush1.msra.mxu0 0.0
    %220 = vmatprep.subr.mxu0 0.0
    %221 = vmatpush1.msra.mxu0 0.0
    %222 = vmatprep.subr.mxu0 0.0
    %223 = vmatpush1.msra.mxu0 0.0
    %224 = vmatprep.subr.mxu0 0.0
    %225 = vmatpush1.msra.mxu0 0.0
    %226 = vmatprep.subr.mxu0 0.0
    %227 = vmatpush1.msra.mxu0 0.0
    %228 = vmatprep.subr.mxu0 0.0
    %229 = vmatpush1.msra.mxu0 0.0
    %230 = vmatprep.subr.mxu0 0.0
    %231 = vmatpush1.msra.mxu0 0.0
    %232 = vmatprep.subr.mxu0 0.0
    %233 = vmatpush1.msra.mxu0 0.0
    %234 = vmatprep.subr.mxu0 0.0
    %235 = vmatpush1.msra.mxu0 0.0
    %236 = vmatprep.subr.mxu0 0.0
    %237 = vmatpush1.msra.mxu0 0.0
    %238 = vmatprep.subr.mxu0 0.0
    %239 = vmatpush1.msra.mxu0 0.0
    %240 = vmatprep.subr.mxu0 0.0
    %241 = vmatpush1.msra.mxu0 0.0
    %242 = vmatprep.subr.mxu0 0.0
    %243 = vmatpush1.msra.mxu0 0.0
    %244 = vmatprep.subr.mxu0 0.0
    %245 = vmatpush1.msra.mxu0 0.0
    %246 = vmatprep.subr.mxu0 0.0
    %247 = vmatpush1.msra.mxu0 %v38
    %248 = vmatprep.subr.mxu0 0.0
    %249 = vmatpush2.msra.mxu0 0.0
    %250 = vmatprep.subr.mxu0 0.0
    %251 = vmatpush2.msra.mxu0 0.0
    %252 = vmatprep.subr.mxu0 0.0
    %253 = vmatpush2.msra.mxu0 0.0
    %254 = vmatprep.subr.mxu0 0.0
    %255 = vmatpush2.msra.mxu0 0.0
    %256 = vmatprep.subr.mxu0 0.0
    %257 = vmatpush2.msra.mxu0 0.0
    %258 = vmatprep.subr.mxu0 0.0
    %259 = vmatpush2.msra.mxu0 0.0
    %260 = vmatprep.subr.mxu0 0.0
    %261 = vmatpush2.msra.mxu0 0.0
    %262 = vmatprep.subr.mxu0 0.0
    %263 = vmatpush2.msra.mxu0 0.0
    %264 = vmatprep.subr.mxu0 0.0
    %265 = vmatpush2.msra.mxu0 0.0
    %266 = vmatprep.subr.mxu0 0.0
    %267 = vmatpush2.msra.mxu0 0.0
    %268 = vmatprep.subr.mxu0 0.0
    %269 = vmatpush2.msra.mxu0 0.0
    %270 = vmatprep.subr.mxu0 0.0
    %271 = vmatpush2.msra.mxu0 0.0
    %272 = vmatprep.subr.mxu0 0.0
    %273 = vmatpush2.msra.mxu0 0.0
    %274 = vmatprep.subr.mxu0 0.0
    %275 = vmatpush2.msra.mxu0 0.0
    %276 = vmatprep.subr.mxu0 0.0
    %277 = vmatpush2.msra.mxu0 0.0
    %278 = vmatprep.subr.mxu0 0.0
    %279 = vmatpush2.msra.mxu0 0.0
    %280 = vmatprep.mubr.f32.mxu0 0.0
    %281 = vmatmul.mubr.f32.gmra.mxu0 %v193
    %v282 = vpop.f32.mrf.mxu0
    %v283 = vadd.f32 %v34, %v282
    %v284 = vpop.f32.mrf.mxu0
    %285 = vmatprep.mubr.f32.mxu0 0.0
    %286 = vmatmul.mubr.f32.gmra.mxu0 %v196
    %v287 = vpop.f32.mrf.mxu0
    %v288 = vadd.f32 %v34, %v287
    %v289 = vpop.f32.mrf.mxu0
    %290 = vmatprep.mubr.f32.mxu0 0.0
    %291 = vmatmul.mubr.f32.gmra.mxu0 %v199
    %v292 = vpop.f32.mrf.mxu0
    %v293 = vadd.f32 %v34, %v292
    %v294 = vpop.f32.mrf.mxu0
    %295 = vmatprep.mubr.f32.mxu0 0.0
    %296 = vmatmul.mubr.f32.gmra.mxu0 %v202
    %v297 = vpop.f32.mrf.mxu0
    %v298 = vadd.f32 %v34, %v297
    %v299 = vpop.f32.mrf.mxu0
    %300 = vmatprep.mubr.f32.mxu0 0.0
    %301 = vmatmul.mubr.f32.gmra.mxu0 %v205
    %v302 = vpop.f32.mrf.mxu0
    %v303 = vadd.f32 %v34, %v302
    %v304 = vpop.f32.mrf.mxu0
    %305 = vmatprep.mubr.f32.mxu0 0.0
    %306 = vmatmul.mubr.f32.gmra.mxu0 %v208
    %v307 = vpop.f32.mrf.mxu0
    %v308 = vadd.f32 %v34, %v307
    %v309 = vpop.f32.mrf.mxu0
    %310 = vmatprep.mubr.f32.mxu0 0.0
    %311 = vmatmul.mubr.f32.gmra.mxu0 %v211
    %v312 = vpop.f32.mrf.mxu0
    %v313 = vadd.f32 %v34, %v312
    %v314 = vpop.f32.mrf.mxu0
    %315 = vmatprep.mubr.f32.mxu0 0.0
    %316 = vmatmul.mubr.f32.gmra.mxu0 %v214
    %v317 = vpop.f32.mrf.mxu0
    %v318 = vadd.f32 %v34, %v317
    %v319 = vpop.f32.mrf.mxu0
    %320 = vdwg.mxu0
    %v321 = vmax.f32 %v283, 0.0
    %v322 = vmax.f32 %v288, 0.0
    %v323 = vmax.f32 %v293, 0.0
    %v324 = vmax.f32 %v298, 0.0
    %v325 = vmax.f32 %v303, 0.0
    %v326 = vmax.f32 %v308, 0.0
    %v327 = vmax.f32 %v313, 0.0
    %v328 = vmax.f32 %v318, 0.0
    %v330 = vlaneseq
    %v331 = vshrl.u32 %v330, 7
    %v332 = vsub.s32 0, %v331
    %v333 = vrot.slane %v36, %v332
    %v334 = vlaneseq
    %v335 = vshrl.u32 %v334, 7
    %v336 = vsub.s32 1, %v335
    %v337 = vrot.slane %v36, %v336
    %v338 = vlaneseq
    %v339 = vshrl.u32 %v338, 7
    %v340 = vsub.s32 2, %v339
    %v341 = vrot.slane %v36, %v340
    %v342 = vlaneseq
    %v343 = vshrl.u32 %v342, 7
    %v344 = vsub.s32 3, %v343
    %v345 = vrot.slane %v36, %v344
    %350 = vmatprep.subr.mxu0 %v100
    %351 = vmatpush1.msra.mxu0 %v99
    %352 = vmatprep.subr.mxu0 %v96
    %353 = vmatpush1.msra.mxu0 %v95
    %354 = vmatprep.subr.mxu0 %v92
    %355 = vmatpush1.msra.mxu0 %v91
    %356 = vmatprep.subr.mxu0 %v88
    %357 = vmatpush1.msra.mxu0 %v87
    %358 = vmatprep.subr.mxu0 %v84
    %359 = vmatpush1.msra.mxu0 %v83
    %360 = vmatprep.subr.mxu0 %v80
    %361 = vmatpush1.msra.mxu0 %v79
    %362 = vmatprep.subr.mxu0 %v76
    %363 = vmatpush1.msra.mxu0 %v75
    %364 = vmatprep.subr.mxu0 %v72
    %365 = vmatpush1.msra.mxu0 %v71
    %366 = vmatprep.subr.mxu0 %v68
    %367 = vmatpush1.msra.mxu0 %v67
    %368 = vmatprep.subr.mxu0 %v64
    %369 = vmatpush1.msra.mxu0 %v63
    %370 = vmatprep.subr.mxu0 %v60
    %371 = vmatpush1.msra.mxu0 %v59
    %372 = vmatprep.subr.mxu0 %v56
    %373 = vmatpush1.msra.mxu0 %v55
    %374 = vmatprep.subr.mxu0 %v52
    %375 = vmatpush1.msra.mxu0 %v51
    %376 = vmatprep.subr.mxu0 %v48
    %377 = vmatpush1.msra.mxu0 %v47
    %378 = vmatprep.subr.mxu0 %v44
    %379 = vmatpush1.msra.mxu0 %v43
    %380 = vmatprep.subr.mxu0 %v40
    %381 = vmatpush1.msra.mxu0 %v39
    %382 = vmatprep.subr.mxu0 0.0
    %383 = vmatpush2.msra.mxu0 0.0
    %384 = vmatprep.subr.mxu0 0.0
    %385 = vmatpush2.msra.mxu0 0.0
    %386 = vmatprep.subr.mxu0 0.0
    %387 = vmatpush2.msra.mxu0 0.0
    %388 = vmatprep.subr.mxu0 0.0
    %389 = vmatpush2.msra.mxu0 0.0
    %390 = vmatprep.subr.mxu0 0.0
    %391 = vmatpush2.msra.mxu0 0.0
    %392 = vmatprep.subr.mxu0 0.0
    %393 = vmatpush2.msra.mxu0 0.0
    %394 = vmatprep.subr.mxu0 0.0
    %395 = vmatpush2.msra.mxu0 0.0
    %396 = vmatprep.subr.mxu0 0.0
    %397 = vmatpush2.msra.mxu0 0.0
    %398 = vmatprep.subr.mxu0 0.0
    %399 = vmatpush2.msra.mxu0 0.0
    %400 = vmatprep.subr.mxu0 0.0
    %401 = vmatpush2.msra.mxu0 0.0
    %402 = vmatprep.subr.mxu0 0.0
    %403 = vmatpush2.msra.mxu0 0.0
    %404 = vmatprep.subr.mxu0 0.0
    %405 = vmatpush2.msra.mxu0 0.0
    %406 = vmatprep.subr.mxu0 0.0
    %407 = vmatpush2.msra.mxu0 0.0
    %408 = vmatprep.subr.mxu0 0.0
    %409 = vmatpush2.msra.mxu0 0.0
    %410 = vmatprep.subr.mxu0 0.0
    %411 = vmatpush2.msra.mxu0 0.0
    %412 = vmatprep.subr.mxu0 0.0
    %413 = vmatpush2.msra.mxu0 0.0
    %414 = vmatprep.mubr.f32.mxu0 0.0
    %415 = vmatmul.mubr.f32.gmra.mxu0 %v321
    %v416 = vpop.f32.mrf.mxu0
    %v417 = vadd.f32 %v333, %v416
    %v418 = vpop.f32.mrf.mxu0
    %v419 = vadd.f32 %v337, %v418
    %420 = vmatprep.mubr.f32.mxu0 0.0
    %421 = vmatmul.mubr.f32.gmra.mxu0 %v322
    %v422 = vpop.f32.mrf.mxu0
    %v423 = vadd.f32 %v333, %v422
    %v424 = vpop.f32.mrf.mxu0
    %v425 = vadd.f32 %v337, %v424
    %426 = vmatprep.mubr.f32.mxu0 0.0
    %427 = vmatmul.mubr.f32.gmra.mxu0 %v323
    %v428 = vpop.f32.mrf.mxu0
    %v429 = vadd.f32 %v333, %v428
    %v430 = vpop.f32.mrf.mxu0
    %v431 = vadd.f32 %v337, %v430
    %432 = vmatprep.mubr.f32.mxu0 0.0
    %433 = vmatmul.mubr.f32.gmra.mxu0 %v324
    %v434 = vpop.f32.mrf.mxu0
    %v435 = vadd.f32 %v333, %v434
    %v436 = vpop.f32.mrf.mxu0
    %v437 = vadd.f32 %v337, %v436
    %438 = vmatprep.mubr.f32.mxu0 0.0
    %439 = vmatmul.mubr.f32.gmra.mxu0 %v325
    %v440 = vpop.f32.mrf.mxu0
    %v441 = vadd.f32 %v333, %v440
    %v442 = vpop.f32.mrf.mxu0
    %v443 = vadd.f32 %v337, %v442
    %444 = vmatprep.mubr.f32.mxu0 0.0
    %445 = vmatmul.mubr.f32.gmra.mxu0 %v326
    %v446 = vpop.f32.mrf.mxu0
    %v447 = vadd.f32 %v333, %v446
    %v448 = vpop.f32.mrf.mxu0
    %v449 = vadd.f32 %v337, %v448
    %450 = vmatprep.mubr.f32.mxu0 0.0
    %451 = vmatmul.mubr.f32.gmra.mxu0 %v327
    %v452 = vpop.f32.mrf.mxu0
    %v453 = vadd.f32 %v333, %v452
    %v454 = vpop.f32.mrf.mxu0
    %v455 = vadd.f32 %v337, %v454
    %456 = vmatprep.mubr.f32.mxu0 0.0
    %457 = vmatmul.mubr.f32.gmra.mxu0 %v328
    %v458 = vpop.f32.mrf.mxu0
    %v459 = vadd.f32 %v333, %v458
    %v460 = vpop.f32.mrf.mxu0
    %v461 = vadd.f32 %v337, %v460
    %462 = vdwg.mxu0
    %463 = vmatprep.subr.mxu0 %v102
    %464 = vmatpush1.msra.mxu0 %v101
    %465 = vmatprep.subr.mxu0 %v98
    %466 = vmatpush1.msra.mxu0 %v97
    %467 = vmatprep.subr.mxu0 %v94
    %468 = vmatpush1.msra.mxu0 %v93
    %469 = vmatprep.subr.mxu0 %v90
    %470 = vmatpush1.msra.mxu0 %v89
    %471 = vmatprep.subr.mxu0 %v86
    %472 = vmatpush1.msra.mxu0 %v85
    %473 = vmatprep.subr.mxu0 %v82
    %474 = vmatpush1.msra.mxu0 %v81
    %475 = vmatprep.subr.mxu0 %v78
    %476 = vmatpush1.msra.mxu0 %v77
    %477 = vmatprep.subr.mxu0 %v74
    %478 = vmatpush1.msra.mxu0 %v73
    %479 = vmatprep.subr.mxu0 %v70
    %480 = vmatpush1.msra.mxu0 %v69
    %481 = vmatprep.subr.mxu0 %v66
    %482 = vmatpush1.msra.mxu0 %v65
    %483 = vmatprep.subr.mxu0 %v62
    %484 = vmatpush1.msra.mxu0 %v61
    %485 = vmatprep.subr.mxu0 %v58
    %486 = vmatpush1.msra.mxu0 %v57
    %487 = vmatprep.subr.mxu0 %v54
    %488 = vmatpush1.msra.mxu0 %v53
    %489 = vmatprep.subr.mxu0 %v50
    %490 = vmatpush1.msra.mxu0 %v49
    %491 = vmatprep.subr.mxu0 %v46
    %492 = vmatpush1.msra.mxu0 %v45
    %493 = vmatprep.subr.mxu0 %v42
    %494 = vmatpush1.msra.mxu0 %v41
    %495 = vmatprep.subr.mxu0 0.0
    %496 = vmatpush2.msra.mxu0 0.0
    %497 = vmatprep.subr.mxu0 0.0
    %498 = vmatpush2.msra.mxu0 0.0
    %499 = vmatprep.subr.mxu0 0.0
    %500 = vmatpush2.msra.mxu0 0.0
    %501 = vmatprep.subr.mxu0 0.0
    %502 = vmatpush2.msra.mxu0 0.0
    %503 = vmatprep.subr.mxu0 0.0
    %504 = vmatpush2.msra.mxu0 0.0
    %505 = vmatprep.subr.mxu0 0.0
    %506 = vmatpush2.msra.mxu0 0.0
    %507 = vmatprep.subr.mxu0 0.0
    %508 = vmatpush2.msra.mxu0 0.0
    %509 = vmatprep.subr.mxu0 0.0
    %510 = vmatpush2.msra.mxu0 0.0
    %511 = vmatprep.subr.mxu0 0.0
    %512 = vmatpush2.msra.mxu0 0.0
    %513 = vmatprep.subr.mxu0 0.0
    %514 = vmatpush2.msra.mxu0 0.0
    %515 = vmatprep.subr.mxu0 0.0
    %516 = vmatpush2.msra.mxu0 0.0
    %517 = vmatprep.subr.mxu0 0.0
    %518 = vmatpush2.msra.mxu0 0.0
    %519 = vmatprep.subr.mxu0 0.0
    %520 = vmatpush2.msra.mxu0 0.0
    %521 = vmatprep.subr.mxu0 0.0
    %522 = vmatpush2.msra.mxu0 0.0
    %523 = vmatprep.subr.mxu0 0.0
    %524 = vmatpush2.msra.mxu0 0.0
    %525 = vmatprep.subr.mxu0 0.0
    %526 = vmatpush2.msra.mxu0 0.0
    %527 = vmatprep.mubr.f32.mxu0 0.0
    %528 = vmatmul.mubr.f32.gmra.mxu0 %v321
    %v529 = vpop.f32.mrf.mxu0
    %v530 = vadd.f32 %v341, %v529
    %v531 = vpop.f32.mrf.mxu0
    %v532 = vadd.f32 %v345, %v531
    %533 = vmatprep.mubr.f32.mxu0 0.0
    %534 = vmatmul.mubr.f32.gmra.mxu0 %v322
    %v535 = vpop.f32.mrf.mxu0
    %v536 = vadd.f32 %v341, %v535
    %v537 = vpop.f32.mrf.mxu0
    %v538 = vadd.f32 %v345, %v537
    %539 = vmatprep.mubr.f32.mxu0 0.0
    %540 = vmatmul.mubr.f32.gmra.mxu0 %v323
    %v541 = vpop.f32.mrf.mxu0
    %v542 = vadd.f32 %v341, %v541
    %v543 = vpop.f32.mrf.mxu0
    %v544 = vadd.f32 %v345, %v543
    %545 = vmatprep.mubr.f32.mxu0 0.0
    %546 = vmatmul.mubr.f32.gmra.mxu0 %v324
    %v547 = vpop.f32.mrf.mxu0
    %v548 = vadd.f32 %v341, %v547
    %v549 = vpop.f32.mrf.mxu0
    %v550 = vadd.f32 %v345, %v549
    %551 = vmatprep.mubr.f32.mxu0 0.0
    %552 = vmatmul.mubr.f32.gmra.mxu0 %v325
    %v553 = vpop.f32.mrf.mxu0
    %v554 = vadd.f32 %v341, %v553
    %v555 = vpop.f32.mrf.mxu0
    %v556 = vadd.f32 %v345, %v555
    %557 = vmatprep.mubr.f32.mxu0 0.0
    %558 = vmatmul.mubr.f32.gmra.mxu0 %v326
    %v559 = vpop.f32.mrf.mxu0
    %v560 = vadd.f32 %v341, %v559
    %v561 = vpop.f32.mrf.mxu0
    %v562 = vadd.f32 %v345, %v561
    %563 = vmatprep.mubr.f32.mxu0 0.0
    %564 = vmatmul.mubr.f32.gmra.mxu0 %v327
    %v565 = vpop.f32.mrf.mxu0
    %v566 = vadd.f32 %v341, %v565
    %v567 = vpop.f32.mrf.mxu0
    %v568 = vadd.f32 %v345, %v567
    %569 = vmatprep.mubr.f32.mxu0 0.0
    %570 = vmatmul.mubr.f32.gmra.mxu0 %v328
    %v571 = vpop.f32.mrf.mxu0
    %v572 = vadd.f32 %v341, %v571
    %v573 = vpop.f32.mrf.mxu0
    %v574 = vadd.f32 %v345, %v573
    %575 = vdwg.mxu0
    %576 = vst [vmem:[#allocation2] sm:$0xff] %v417
    %577 = vst [vmem:[#allocation2 + $0x8] sm:$0xff] %v419
    %578 = vst [vmem:[#allocation2 + $0x10] sm:$0xff] %v530
    %579 = vst [vmem:[#allocation2 + $0x18] sm:$0xff] %v532
    %580 = vst [vmem:[#allocation2 + $0x20] sm:$0xff] %v423
    %581 = vst [vmem:[#allocation2 + $0x28] sm:$0xff] %v425
    %582 = vst [vmem:[#allocation2 + $0x30] sm:$0xff] %v536
    %583 = vst [vmem:[#allocation2 + $0x38] sm:$0xff] %v538
    %584 = vst [vmem:[#allocation2 + $0x40] sm:$0xff] %v429
    %585 = vst [vmem:[#allocation2 + $0x48] sm:$0xff] %v431
    %586 = vst [vmem:[#allocation2 + $0x50] sm:$0xff] %v542
    %587 = vst [vmem:[#allocation2 + $0x58] sm:$0xff] %v544
    %588 = vst [vmem:[#allocation2 + $0x60] sm:$0xff] %v435
    %589 = vst [vmem:[#allocation2 + $0x68] sm:$0xff] %v437
    %590 = vst [vmem:[#allocation2 + $0x70] sm:$0xff] %v548
    %591 = vst [vmem:[#allocation2 + $0x78] sm:$0xff] %v550
    %592 = vst [vmem:[#allocation2 + $0x80] sm:$0xff] %v441
    %593 = vst [vmem:[#allocation2 + $0x88] sm:$0xff] %v443
    %594 = vst [vmem:[#allocation2 + $0x90] sm:$0xff] %v554
    %595 = vst [vmem:[#allocation2 + $0x98] sm:$0xff] %v556
    %596 = vst [vmem:[#allocation2 + $0xa0] sm:$0xff] %v447
    %597 = vst [vmem:[#allocation2 + $0xa8] sm:$0xff] %v449
    %598 = vst [vmem:[#allocation2 + $0xb0] sm:$0xff] %v560
    %599 = vst [vmem:[#allocation2 + $0xb8] sm:$0xff] %v562
    %600 = vst [vmem:[#allocation2 + $0xc0] sm:$0xff] %v453
    %601 = vst [vmem:[#allocation2 + $0xc8] sm:$0xff] %v455
    %602 = vst [vmem:[#allocation2 + $0xd0] sm:$0xff] %v566
    %603 = vst [vmem:[#allocation2 + $0xd8] sm:$0xff] %v568
    %604 = vst [vmem:[#allocation2 + $0xe0] sm:$0xff] %v459
    %605 = vst [vmem:[#allocation2 + $0xe8] sm:$0xff] %v461
    %606 = vst [vmem:[#allocation2 + $0xf0] sm:$0xff] %v572
    %607 = vst [vmem:[#allocation2 + $0xf8] sm:$0xff] %v574
    %v608 = vld [vmem:[%s1] sm:$0xff]
    %v609 = vld [vmem:[%s2] sm:$0xff]
    %s610 = smul.u32 0, 4
    %s611 = smul.addr %s610, 8
    %s612 = scalar_lea.vmem [#allocation2], %s611
    %v613 = vld [vmem:[%s612] sm:$0xff]
    %v614 = vld [vmem:[%s612 + $0x8] sm:$0xff]
    %v615 = vld [vmem:[%s612 + $0x10] sm:$0xff]
    %v616 = vld [vmem:[%s612 + $0x18] sm:$0xff]
    %617 = vmatprep.subr.mxu0 %v164
    %618 = vmatpush1.msra.mxu0 %v163
    %619 = vmatprep.subr.mxu0 %v160
    %620 = vmatpush1.msra.mxu0 %v159
    %621 = vmatprep.subr.mxu0 %v156
    %622 = vmatpush1.msra.mxu0 %v155
    %623 = vmatprep.subr.mxu0 %v152
    %624 = vmatpush1.msra.mxu0 %v151
    %625 = vmatprep.subr.mxu0 %v148
    %626 = vmatpush1.msra.mxu0 %v147
    %627 = vmatprep.subr.mxu0 %v144
    %628 = vmatpush1.msra.mxu0 %v143
    %629 = vmatprep.subr.mxu0 %v140
    %630 = vmatpush1.msra.mxu0 %v139
    %631 = vmatprep.subr.mxu0 %v136
    %632 = vmatpush1.msra.mxu0 %v135
    %633 = vmatprep.subr.mxu0 %v132
    %634 = vmatpush1.msra.mxu0 %v131
    %635 = vmatprep.subr.mxu0 %v128
    %636 = vmatpush1.msra.mxu0 %v127
    %637 = vmatprep.subr.mxu0 %v124
    %638 = vmatpush1.msra.mxu0 %v123
    %639 = vmatprep.subr.mxu0 %v120
    %640 = vmatpush1.msra.mxu0 %v119
    %641 = vmatprep.subr.mxu0 %v116
    %642 = vmatpush1.msra.mxu0 %v115
    %643 = vmatprep.subr.mxu0 %v112
    %644 = vmatpush1.msra.mxu0 %v111
    %645 = vmatprep.subr.mxu0 %v108
    %646 = vmatpush1.msra.mxu0 %v107
    %647 = vmatprep.subr.mxu0 %v104
    %648 = vmatpush1.msra.mxu0 %v103
    %649 = vmatprep.subr.mxu0 0.0
    %650 = vmatpush2.msra.mxu0 0.0
    %651 = vmatprep.subr.mxu0 0.0
    %652 = vmatpush2.msra.mxu0 0.0
    %653 = vmatprep.subr.mxu0 0.0
    %654 = vmatpush2.msra.mxu0 0.0
    %655 = vmatprep.subr.mxu0 0.0
    %656 = vmatpush2.msra.mxu0 0.0
    %657 = vmatprep.subr.mxu0 0.0
    %658 = vmatpush2.msra.mxu0 0.0
    %659 = vmatprep.subr.mxu0 0.0
    %660 = vmatpush2.msra.mxu0 0.0
    %661 = vmatprep.subr.mxu0 0.0
    %662 = vmatpush2.msra.mxu0 0.0
    %663 = vmatprep.subr.mxu0 0.0
    %664 = vmatpush2.msra.mxu0 0.0
    %665 = vmatprep.subr.mxu0 0.0
    %666 = vmatpush2.msra.mxu0 0.0
    %667 = vmatprep.subr.mxu0 0.0
    %668 = vmatpush2.msra.mxu0 0.0
    %669 = vmatprep.subr.mxu0 0.0
    %670 = vmatpush2.msra.mxu0 0.0
    %671 = vmatprep.subr.mxu0 0.0
    %672 = vmatpush2.msra.mxu0 0.0
    %673 = vmatprep.subr.mxu0 0.0
    %674 = vmatpush2.msra.mxu0 0.0
    %675 = vmatprep.subr.mxu0 0.0
    %676 = vmatpush2.msra.mxu0 0.0
    %677 = vmatprep.subr.mxu0 0.0
    %678 = vmatpush2.msra.mxu0 0.0
    %679 = vmatprep.subr.mxu0 0.0
    %680 = vmatpush2.msra.mxu0 0.0
    %681 = vmatprep.mubr.f32.mxu0 0.0
    %682 = vmatmul.mubr.f32.gmra.mxu0 %v608
    %v683 = vpop.f32.mrf.mxu0
    %v684 = vadd.f32 0.0, %v683
    %v685 = vpop.f32.mrf.mxu0
    %v686 = vadd.f32 0.0, %v685
    %687 = vdwg.mxu0
    %688 = vmatprep.subr.mxu0 %v166
    %689 = vmatpush1.msra.mxu0 %v165
    %690 = vmatprep.subr.mxu0 %v162
    %691 = vmatpush1.msra.mxu0 %v161
    %692 = vmatprep.subr.mxu0 %v158
    %693 = vmatpush1.msra.mxu0 %v157
    %694 = vmatprep.subr.mxu0 %v154
    %695 = vmatpush1.msra.mxu0 %v153
    %696 = vmatprep.subr.mxu0 %v150
    %697 = vmatpush1.msra.mxu0 %v149
    %698 = vmatprep.subr.mxu0 %v146
    %699 = vmatpush1.msra.mxu0 %v145
    %700 = vmatprep.subr.mxu0 %v142
    %701 = vmatpush1.msra.mxu0 %v141
    %702 = vmatprep.subr.mxu0 %v138
    %703 = vmatpush1.msra.mxu0 %v137
    %704 = vmatprep.subr.mxu0 %v134
    %705 = vmatpush1.msra.mxu0 %v133
    %706 = vmatprep.subr.mxu0 %v130
    %707 = vmatpush1.msra.mxu0 %v129
    %708 = vmatprep.subr.mxu0 %v126
    %709 = vmatpush1.msra.mxu0 %v125
    %710 = vmatprep.subr.mxu0 %v122
    %711 = vmatpush1.msra.mxu0 %v121
    %712 = vmatprep.subr.mxu0 %v118
    %713 = vmatpush1.msra.mxu0 %v117
    %714 = vmatprep.subr.mxu0 %v114
    %715 = vmatpush1.msra.mxu0 %v113
    %716 = vmatprep.subr.mxu0 %v110
    %717 = vmatpush1.msra.mxu0 %v109
    %718 = vmatprep.subr.mxu0 %v106
    %719 = vmatpush1.msra.mxu0 %v105
    %720 = vmatprep.subr.mxu0 0.0
    %721 = vmatpush2.msra.mxu0 0.0
    %722 = vmatprep.subr.mxu0 0.0
    %723 = vmatpush2.msra.mxu0 0.0
    %724 = vmatprep.subr.mxu0 0.0
    %725 = vmatpush2.msra.mxu0 0.0
    %726 = vmatprep.subr.mxu0 0.0
    %727 = vmatpush2.msra.mxu0 0.0
    %728 = vmatprep.subr.mxu0 0.0
    %729 = vmatpush2.msra.mxu0 0.0
    %730 = vmatprep.subr.mxu0 0.0
    %731 = vmatpush2.msra.mxu0 0.0
    %732 = vmatprep.subr.mxu0 0.0
    %733 = vmatpush2.msra.mxu0 0.0
    %734 = vmatprep.subr.mxu0 0.0
    %735 = vmatpush2.msra.mxu0 0.0
    %736 = vmatprep.subr.mxu0 0.0
    %737 = vmatpush2.msra.mxu0 0.0
    %738 = vmatprep.subr.mxu0 0.0
    %739 = vmatpush2.msra.mxu0 0.0
    %740 = vmatprep.subr.mxu0 0.0
    %741 = vmatpush2.msra.mxu0 0.0
    %742 = vmatprep.subr.mxu0 0.0
    %743 = vmatpush2.msra.mxu0 0.0
    %744 = vmatprep.subr.mxu0 0.0
    %745 = vmatpush2.msra.mxu0 0.0
    %746 = vmatprep.subr.mxu0 0.0
    %747 = vmatpush2.msra.mxu0 0.0
    %748 = vmatprep.subr.mxu0 0.0
    %749 = vmatpush2.msra.mxu0 0.0
    %750 = vmatprep.subr.mxu0 0.0
    %751 = vmatpush2.msra.mxu0 0.0
    %752 = vmatprep.mubr.f32.mxu0 0.0
    %753 = vmatmul.mubr.f32.gmra.mxu0 %v608
    %v754 = vpop.f32.mrf.mxu0
    %v755 = vadd.f32 0.0, %v754
    %v756 = vpop.f32.mrf.mxu0
    %v757 = vadd.f32 0.0, %v756
    %758 = vdwg.mxu0
    %v759 = vadd.f32 %v613, %v684
    %v760 = vadd.f32 %v614, %v686
    %v761 = vadd.f32 %v615, %v755
    %v762 = vadd.f32 %v616, %v757
    %v763 = vtanh.pop %v759
    %v764 = vtanh.pop %v760
    %v765 = vtanh.pop %v761
    %v766 = vtanh.pop %v762
    %v767 = vmul.f32 %v763, 0.5
    %v768 = vadd.f32 %v767, 0.5
    %v769 = vmul.f32 %v764, 0.5
    %v770 = vadd.f32 %v769, 0.5
    %v771 = vmul.f32 %v766, 0.5
    %v772 = vadd.f32 %v771, 0.5
    %v773 = vmul.f32 %v770, %v609
    %v774 = vmul.f32 %v768, %v765
    %v775 = vadd.f32 %v773, %v774
    %v776 = vtanh.pop %v775
    %v777 = vmul.f32 %v772, %v776
    %778 = vst [vmem:[#allocation3] sm:$0xff] %v777
    %s779 = smul.u32 1, 4
    %s780 = smul.addr %s779, 8
    %s781 = scalar_lea.vmem [#allocation2], %s780
    %v782 = vld [vmem:[%s781] sm:$0xff]
    %v783 = vld [vmem:[%s781 + $0x8] sm:$0xff]
    %v784 = vld [vmem:[%s781 + $0x10] sm:$0xff]
    %v785 = vld [vmem:[%s781 + $0x18] sm:$0xff]
    %786 = vmatprep.subr.mxu0 %v164
    %787 = vmatpush1.msra.mxu0 %v163
    %788 = vmatprep.subr.mxu0 %v160
    %789 = vmatpush1.msra.mxu0 %v159
    %790 = vmatprep.subr.mxu0 %v156
    %791 = vmatpush1.msra.mxu0 %v155
    %792 = vmatprep.subr.mxu0 %v152
    %793 = vmatpush1.msra.mxu0 %v151
    %794 = vmatprep.subr.mxu0 %v148
    %795 = vmatpush1.msra.mxu0 %v147
    %796 = vmatprep.subr.mxu0 %v144
    %797 = vmatpush1.msra.mxu0 %v143
    %798 = vmatprep.subr.mxu0 %v140
    %799 = vmatpush1.msra.mxu0 %v139
    %800 = vmatprep.subr.mxu0 %v136
    %801 = vmatpush1.msra.mxu0 %v135
    %802 = vmatprep.subr.mxu0 %v132
    %803 = vmatpush1.msra.mxu0 %v131
    %804 = vmatprep.subr.mxu0 %v128
    %805 = vmatpush1.msra.mxu0 %v127
    %806 = vmatprep.subr.mxu0 %v124
    %807 = vmatpush1.msra.mxu0 %v123
    %808 = vmatprep.subr.mxu0 %v120
    %809 = vmatpush1.msra.mxu0 %v119
    %810 = vmatprep.subr.mxu0 %v116
    %811 = vmatpush1.msra.mxu0 %v115
    %812 = vmatprep.subr.mxu0 %v112
    %813 = vmatpush1.msra.mxu0 %v111
    %814 = vmatprep.subr.mxu0 %v108
    %815 = vmatpush1.msra.mxu0 %v107
    %816 = vmatprep.subr.mxu0 %v104
    %817 = vmatpush1.msra.mxu0 %v103
    %818 = vmatprep.subr.mxu0 0.0
    %819 = vmatpush2.msra.mxu0 0.0
    %820 = vmatprep.subr.mxu0 0.0
    %821 = vmatpush2.msra.mxu0 0.0
    %822 = vmatprep.subr.mxu0 0.0
    %823 = vmatpush2.msra.mxu0 0.0
    %824 = vmatprep.subr.mxu0 0.0
    %825 = vmatpush2.msra.mxu0 0.0
    %826 = vmatprep.subr.mxu0 0.0
    %827 = vmatpush2.msra.mxu0 0.0
    %828 = vmatprep.subr.mxu0 0.0
    %829 = vmatpush2.msra.mxu0 0.0
    %830 = vmatprep.subr.mxu0 0.0
    %831 = vmatpush2.msra.mxu0 0.0
    %832 = vmatprep.subr.mxu0 0.0
    %833 = vmatpush2.msra.mxu0 0.0
    %834 = vmatprep.subr.mxu0 0.0
    %835 = vmatpush2.msra.mxu0 0.0
    %836 = vmatprep.subr.mxu0 0.0
    %837 = vmatpush2.msra.mxu0 0.0
    %838 = vmatprep.subr.mxu0 0.0
    %839 = vmatpush2.msra.mxu0 0.0
    %840 = vmatprep.subr.mxu0 0.0
    %841 = vmatpush2.msra.mxu0 0.0
    %842 = vmatprep.subr.mxu0 0.0
    %843 = vmatpush2.msra.mxu0 0.0
    %844 = vmatprep.subr.mxu0 0.0
    %845 = vmatpush2.msra.mxu0 0.0
    %846 = vmatprep.subr.mxu0 0.0
    %847 = vmatpush2.msra.mxu0 0.0
    %848 = vmatprep.subr.mxu0 0.0
    %849 = vmatpush2.msra.mxu0 0.0
    %850 = vmatprep.mubr.f32.mxu0 0.0
    %851 = vmatmul.mubr.f32.gmra.mxu0 %v777
    %v852 = vpop.f32.mrf.mxu0
    %v853 = vadd.f32 0.0, %v852
    %v854 = vpop.f32.mrf.mxu0
    %v855 = vadd.f32 0.0, %v854
    %856 = vdwg.mxu0
    %857 = vmatprep.subr.mxu0 %v166
    %858 = vmatpush1.msra.mxu0 %v165
    %859 = vmatprep.subr.mxu0 %v162
    %860 = vmatpush1.msra.mxu0 %v161
    %861 = vmatprep.subr.mxu0 %v158
    %862 = vmatpush1.msra.mxu0 %v157
    %863 = vmatprep.subr.mxu0 %v154
    %864 = vmatpush1.msra.mxu0 %v153
    %865 = vmatprep.subr.mxu0 %v150
    %866 = vmatpush1.msra.mxu0 %v149
    %867 = vmatprep.subr.mxu0 %v146
    %868 = vmatpush1.msra.mxu0 %v145
    %869 = vmatprep.subr.mxu0 %v142
    %870 = vmatpush1.msra.mxu0 %v141
    %871 = vmatprep.subr.mxu0 %v138
    %872 = vmatpush1.msra.mxu0 %v137
    %873 = vmatprep.subr.mxu0 %v134
    %874 = vmatpush1.msra.mxu0 %v133
    %875 = vmatprep.subr.mxu0 %v130
    %876 = vmatpush1.msra.mxu0 %v129
    %877 = vmatprep.subr.mxu0 %v126
    %878 = vmatpush1.msra.mxu0 %v125
    %879 = vmatprep.subr.mxu0 %v122
    %880 = vmatpush1.msra.mxu0 %v121
    %881 = vmatprep.subr.mxu0 %v118
    %882 = vmatpush1.msra.mxu0 %v117
    %883 = vmatprep.subr.mxu0 %v114
    %884 = vmatpush1.msra.mxu0 %v113
    %885 = vmatprep.subr.mxu0 %v110
    %886 = vmatpush1.msra.mxu0 %v109
    %887 = vmatprep.subr.mxu0 %v106
    %888 = vmatpush1.msra.mxu0 %v105
    %889 = vmatprep.subr.mxu0 0.0
    %890 = vmatpush2.msra.mxu0 0.0
    %891 = vmatprep.subr.mxu0 0.0
    %892 = vmatpush2.msra.mxu0 0.0
    %893 = vmatprep.subr.mxu0 0.0
    %894 = vmatpush2.msra.mxu0 0.0
    %895 = vmatprep.subr.mxu0 0.0
    %896 = vmatpush2.msra.mxu0 0.0
    %897 = vmatprep.subr.mxu0 0.0
    %898 = vmatpush2.msra.mxu0 0.0
    %899 = vmatprep.subr.mxu0 0.0
    %900 = vmatpush2.msra.mxu0 0.0
    %901 = vmatprep.subr.mxu0 0.0
    %902 = vmatpush2.msra.mxu0 0.0
    %903 = vmatprep.subr.mxu0 0.0
    %904 = vmatpush2.msra.mxu0 0.0
    %905 = vmatprep.subr.mxu0 0.0
    %906 = vmatpush2.msra.mxu0 0.0
    %907 = vmatprep.subr.mxu0 0.0
    %908 = vmatpush2.msra.mxu0 0.0
    %909 = vmatprep.subr.mxu0 0.0
    %910 = vmatpush2.msra.mxu0 0.0
    %911 = vmatprep.subr.mxu0 0.0
    %912 = vmatpush2.msra.mxu0 0.0
    %913 = vmatprep.subr.mxu0 0.0
    %914 = vmatpush2.msra.mxu0 0.0
    %915 = vmatprep.subr.mxu0 0.0
    %916 = vmatpush2.msra.mxu0 0.0
    %917 = vmatprep.subr.mxu0 0.0
    %918 = vmatpush2.msra.mxu0 0.0
    %919 = vmatprep.subr.mxu0 0.0
    %920 = vmatpush2.msra.mxu0 0.0
    %921 = vmatprep.mubr.f32.mxu0 0.0
    %922 = vmatmul.mubr.f32.gmra.mxu0 %v777
    %v923 = vpop.f32.mrf.mxu0
    %v924 = vadd.f32 0.0, %v923
    %v925 = vpop.f32.mrf.mxu0
    %v926 = vadd.f32 0.0, %v925
    %927 = vdwg.mxu0
    %v928 = vadd.f32 %v782, %v853
    %v929 = vadd.f32 %v783, %v855
    %v930 = vadd.f32 %v784, %v924
    %v931 = vadd.f32 %v785, %v926
    %v932 = vtanh.pop %v928
    %v933 = vtanh.pop %v929
    %v934 = vtanh.pop %v930
    %v935 = vtanh.pop %v931
    %v936 = vmul.f32 %v932, 0.5
    %v937 = vadd.f32 %v936, 0.5
    %v938 = vmul.f32 %v933, 0.5
    %v939 = vadd.f32 %v938, 0.5
    %v940 = vmul.f32 %v935, 0.5
    %v941 = vadd.f32 %v940, 0.5
    %v942 = vmul.f32 %v939, %v775
    %v943 = vmul.f32 %v937, %v934
    %v944 = vadd.f32 %v942, %v943
    %v945 = vtanh.pop %v944
    %v946 = vmul.f32 %v941, %v945
    %s947 = scalar_lea.vmem [#allocation3], 8
    %948 = vst [vmem:[%s947] sm:$0xff] %v946
    %s949 = smul.u32 2, 4
    %s950 = smul.addr %s949, 8
    %s951 = scalar_lea.vmem [#allocation2], %s950
    %v952 = vld [vmem:[%s951] sm:$0xff]
    %v953 = vld [vmem:[%s951 + $0x8] sm:$0xff]
    %v954 = vld [vmem:[%s951 + $0x10] sm:$0xff]
    %v955 = vld [vmem:[%s951 + $0x18] sm:$0xff]
    %956 = vmatprep.subr.mxu0 %v164
    %957 = vmatpush1.msra.mxu0 %v163
    %958 = vmatprep.subr.mxu0 %v160
    %959 = vmatpush1.msra.mxu0 %v159
    %960 = vmatprep.subr.mxu0 %v156
    %961 = vmatpush1.msra.mxu0 %v155
    %962 = vmatprep.subr.mxu0 %v152
    %963 = vmatpush1.msra.mxu0 %v151
    %964 = vmatprep.subr.mxu0 %v148
    %965 = vmatpush1.msra.mxu0 %v147
    %966 = vmatprep.subr.mxu0 %v144
    %967 = vmatpush1.msra.mxu0 %v143
    %968 = vmatprep.subr.mxu0 %v140
    %969 = vmatpush1.msra.mxu0 %v139
    %970 = vmatprep.subr.mxu0 %v136
    %971 = vmatpush1.msra.mxu0 %v135
    %972 = vmatprep.subr.mxu0 %v132
    %973 = vmatpush1.msra.mxu0 %v131
    %974 = vmatprep.subr.mxu0 %v128
    %975 = vmatpush1.msra.mxu0 %v127
    %976 = vmatprep.subr.mxu0 %v124
    %977 = vmatpush1.msra.mxu0 %v123
    %978 = vmatprep.subr.mxu0 %v120
    %979 = vmatpush1.msra.mxu0 %v119
    %980 = vmatprep.subr.mxu0 %v116
    %981 = vmatpush1.msra.mxu0 %v115
    %982 = vmatprep.subr.mxu0 %v112
    %983 = vmatpush1.msra.mxu0 %v111
    %984 = vmatprep.subr.mxu0 %v108
    %985 = vmatpush1.msra.mxu0 %v107
    %986 = vmatprep.subr.mxu0 %v104
    %987 = vmatpush1.msra.mxu0 %v103
    %988 = vmatprep.subr.mxu0 0.0
    %989 = vmatpush2.msra.mxu0 0.0
    %990 = vmatprep.subr.mxu0 0.0
    %991 = vmatpush2.msra.mxu0 0.0
    %992 = vmatprep.subr.mxu0 0.0
    %993 = vmatpush2.msra.mxu0 0.0
    %994 = vmatprep.subr.mxu0 0.0
    %995 = vmatpush2.msra.mxu0 0.0
    %996 = vmatprep.subr.mxu0 0.0
    %997 = vmatpush2.msra.mxu0 0.0
    %998 = vmatprep.subr.mxu0 0.0
    %999 = vmatpush2.msra.mxu0 0.0
    %1000 = vmatprep.subr.mxu0 0.0
    %1001 = vmatpush2.msra.mxu0 0.0
    %1002 = vmatprep.subr.mxu0 0.0
    %1003 = vmatpush2.msra.mxu0 0.0
    %1004 = vmatprep.subr.mxu0 0.0
    %1005 = vmatpush2.msra.mxu0 0.0
    %1006 = vmatprep.subr.mxu0 0.0
    %1007 = vmatpush2.msra.mxu0 0.0
    %1008 = vmatprep.subr.mxu0 0.0
    %1009 = vmatpush2.msra.mxu0 0.0
    %1010 = vmatprep.subr.mxu0 0.0
    %1011 = vmatpush2.msra.mxu0 0.0
    %1012 = vmatprep.subr.mxu0 0.0
    %1013 = vmatpush2.msra.mxu0 0.0
    %1014 = vmatprep.subr.mxu0 0.0
    %1015 = vmatpush2.msra.mxu0 0.0
    %1016 = vmatprep.subr.mxu0 0.0
    %1017 = vmatpush2.msra.mxu0 0.0
    %1018 = vmatprep.subr.mxu0 0.0
    %1019 = vmatpush2.msra.mxu0 0.0
    %1020 = vmatprep.mubr.f32.mxu0 0.0
    %1021 = vmatmul.mubr.f32.gmra.mxu0 %v946
    %v1022 = vpop.f32.mrf.mxu0
    %v1023 = vadd.f32 0.0, %v1022
    %v1024 = vpop.f32.mrf.mxu0
    %v1025 = vadd.f32 0.0, %v1024
    %1026 = vdwg.mxu0
    %1027 = vmatprep.subr.mxu0 %v166
    %1028 = vmatpush1.msra.mxu0 %v165
    %1029 = vmatprep.subr.mxu0 %v162
    %1030 = vmatpush1.msra.mxu0 %v161
    %1031 = vmatprep.subr.mxu0 %v158
    %1032 = vmatpush1.msra.mxu0 %v157
    %1033 = vmatprep.subr.mxu0 %v154
    %1034 = vmatpush1.msra.mxu0 %v153
    %1035 = vmatprep.subr.mxu0 %v150
    %1036 = vmatpush1.msra.mxu0 %v149
    %1037 = vmatprep.subr.mxu0 %v146
    %1038 = vmatpush1.msra.mxu0 %v145
    %1039 = vmatprep.subr.mxu0 %v142
    %1040 = vmatpush1.msra.mxu0 %v141
    %1041 = vmatprep.subr.mxu0 %v138
    %1042 = vmatpush1.msra.mxu0 %v137
    %1043 = vmatprep.subr.mxu0 %v134
    %1044 = vmatpush1.msra.mxu0 %v133
    %1045 = vmatprep.subr.mxu0 %v130
    %1046 = vmatpush1.msra.mxu0 %v129
    %1047 = vmatprep.subr.mxu0 %v126
    %1048 = vmatpush1.msra.mxu0 %v125
    %1049 = vmatprep.subr.mxu0 %v122
    %1050 = vmatpush1.msra.mxu0 %v121
    %1051 = vmatprep.subr.mxu0 %v118
    %1052 = vmatpush1.msra.mxu0 %v117
    %1053 = vmatprep.subr.mxu0 %v114
    %1054 = vmatpush1.msra.mxu0 %v113
    %1055 = vmatprep.subr.mxu0 %v110
    %1056 = vmatpush1.msra.mxu0 %v109
    %1057 = vmatprep.subr.mxu0 %v106
    %1058 = vmatpush1.msra.mxu0 %v105
    %1059 = vmatprep.subr.mxu0 0.0
    %1060 = vmatpush2.msra.mxu0 0.0
    %1061 = vmatprep.subr.mxu0 0.0
    %1062 = vmatpush2.msra.mxu0 0.0
    %1063 = vmatprep.subr.mxu0 0.0
    %1064 = vmatpush2.msra.mxu0 0.0
    %1065 = vmatprep.subr.mxu0 0.0
    %1066 = vmatpush2.msra.mxu0 0.0
    %1067 = vmatprep.subr.mxu0 0.0
    %1068 = vmatpush2.msra.mxu0 0.0
    %1069 = vmatprep.subr.mxu0 0.0
    %1070 = vmatpush2.msra.mxu0 0.0
    %1071 = vmatprep.subr.mxu0 0.0
    %1072 = vmatpush2.msra.mxu0 0.0
    %1073 = vmatprep.subr.mxu0 0.0
    %1074 = vmatpush2.msra.mxu0 0.0
    %1075 = vmatprep.subr.mxu0 0.0
    %1076 = vmatpush2.msra.mxu0 0.0
    %1077 = vmatprep.subr.mxu0 0.0
    %1078 = vmatpush2.msra.mxu0 0.0
    %1079 = vmatprep.subr.mxu0 0.0
    %1080 = vmatpush2.msra.mxu0 0.0
    %1081 = vmatprep.subr.mxu0 0.0
    %1082 = vmatpush2.msra.mxu0 0.0
    %1083 = vmatprep.subr.mxu0 0.0
    %1084 = vmatpush2.msra.mxu0 0.0
    %1085 = vmatprep.subr.mxu0 0.0
    %1086 = vmatpush2.msra.mxu0 0.0
    %1087 = vmatprep.subr.mxu0 0.0
    %1088 = vmatpush2.msra.mxu0 0.0
    %1089 = vmatprep.subr.mxu0 0.0
    %1090 = vmatpush2.msra.mxu0 0.0
    %1091 = vmatprep.mubr.f32.mxu0 0.0
    %1092 = vmatmul.mubr.f32.gmra.mxu0 %v946
    %v1093 = vpop.f32.mrf.mxu0
    %v1094 = vadd.f32 0.0, %v1093
    %v1095 = vpop.f32.mrf.mxu0
    %v1096 = vadd.f32 0.0, %v1095
    %1097 = vdwg.mxu0
    %v1098 = vadd.f32 %v952, %v1023
    %v1099 = vadd.f32 %v953, %v1025
    %v1100 = vadd.f32 %v954, %v1094
    %v1101 = vadd.f32 %v955, %v1096
    %v1102 = vtanh.pop %v1098
    %v1103 = vtanh.pop %v1099
    %v1104 = vtanh.pop %v1100
    %v1105 = vtanh.pop %v1101
    %v1106 = vmul.f32 %v1102, 0.5
    %v1107 = vadd.f32 %v1106, 0.5
    %v1108 = vmul.f32 %v1103, 0.5
    %v1109 = vadd.f32 %v1108, 0.5
    %v1110 = vmul.f32 %v1105, 0.5
    %v1111 = vadd.f32 %v1110, 0.5
    %v1112 = vmul.f32 %v1109, %v944
    %v1113 = vmul.f32 %v1107, %v1104
    %v1114 = vadd.f32 %v1112, %v1113
    %v1115 = vtanh.pop %v1114
    %v1116 = vmul.f32 %v1111, %v1115
    %s1117 = scalar_lea.vmem [#allocation3], 16
    %1118 = vst [vmem:[%s1117] sm:$0xff] %v1116
    %s1119 = smul.u32 3, 4
    %s1120 = smul.addr %s1119, 8
    %s1121 = scalar_lea.vmem [#allocation2], %s1120
    %v1122 = vld [vmem:[%s1121] sm:$0xff]
    %v1123 = vld [vmem:[%s1121 + $0x8] sm:$0xff]
    %v1124 = vld [vmem:[%s1121 + $0x10] sm:$0xff]
    %v1125 = vld [vmem:[%s1121 + $0x18] sm:$0xff]
    %1126 = vmatprep.subr.mxu0 %v164
    %1127 = vmatpush1.msra.mxu0 %v163
    %1128 = vmatprep.subr.mxu0 %v160
    %1129 = vmatpush1.msra.mxu0 %v159
    %1130 = vmatprep.subr.mxu0 %v156
    %1131 = vmatpush1.msra.mxu0 %v155
    %1132 = vmatprep.subr.mxu0 %v152
    %1133 = vmatpush1.msra.mxu0 %v151
    %1134 = vmatprep.subr.mxu0 %v148
    %1135 = vmatpush1.msra.mxu0 %v147
    %1136 = vmatprep.subr.mxu0 %v144
    %1137 = vmatpush1.msra.mxu0 %v143
    %1138 = vmatprep.subr.mxu0 %v140
    %1139 = vmatpush1.msra.mxu0 %v139
    %1140 = vmatprep.subr.mxu0 %v136
    %1141 = vmatpush1.msra.mxu0 %v135
    %1142 = vmatprep.subr.mxu0 %v132
    %1143 = vmatpush1.msra.mxu0 %v131
    %1144 = vmatprep.subr.mxu0 %v128
    %1145 = vmatpush1.msra.mxu0 %v127
    %1146 = vmatprep.subr.mxu0 %v124
    %1147 = vmatpush1.msra.mxu0 %v123
    %1148 = vmatprep.subr.mxu0 %v120
    %1149 = vmatpush1.msra.mxu0 %v119
    %1150 = vmatprep.subr.mxu0 %v116
    %1151 = vmatpush1.msra.mxu0 %v115
    %1152 = vmatprep.subr.mxu0 %v112
    %1153 = vmatpush1.msra.mxu0 %v111
    %1154 = vmatprep.subr.mxu0 %v108
    %1155 = vmatpush1.msra.mxu0 %v107
    %1156 = vmatprep.subr.mxu0 %v104
    %1157 = vmatpush1.msra.mxu0 %v103
    %1158 = vmatprep.subr.mxu0 0.0
    %1159 = vmatpush2.msra.mxu0 0.0
    %1160 = vmatprep.subr.mxu0 0.0
    %1161 = vmatpush2.msra.mxu0 0.0
    %1162 = vmatprep.subr.mxu0 0.0
    %1163 = vmatpush2.msra.mxu0 0.0
    %1164 = vmatprep.subr.mxu0 0.0
    %1165 = vmatpush2.msra.mxu0 0.0
    %1166 = vmatprep.subr.mxu0 0.0
    %1167 = vmatpush2.msra.mxu0 0.0
    %1168 = vmatprep.subr.mxu0 0.0
    %1169 = vmatpush2.msra.mxu0 0.0
    %1170 = vmatprep.subr.mxu0 0.0
    %1171 = vmatpush2.msra.mxu0 0.0
    %1172 = vmatprep.subr.mxu0 0.0
    %1173 = vmatpush2.msra.mxu0 0.0
    %1174 = vmatprep.subr.mxu0 0.0
    %1175 = vmatpush2.msra.mxu0 0.0
    %1176 = vmatprep.subr.mxu0 0.0
    %1177 = vmatpush2.msra.mxu0 0.0
    %1178 = vmatprep.subr.mxu0 0.0
    %1179 = vmatpush2.msra.mxu0 0.0
    %1180 = vmatprep.subr.mxu0 0.0
    %1181 = vmatpush2.msra.mxu0 0.0
    %1182 = vmatprep.subr.mxu0 0.0
    %1183 = vmatpush2.msra.mxu0 0.0
    %1184 = vmatprep.subr.mxu0 0.0
    %1185 = vmatpush2.msra.mxu0 0.0
    %1186 = vmatprep.subr.mxu0 0.0
    %1187 = vmatpush2.msra.mxu0 0.0
    %1188 = vmatprep.subr.mxu0 0.0
    %1189 = vmatpush2.msra.mxu0 0.0
    %1190 = vmatprep.mubr.f32.mxu0 0.0
    %1191 = vmatmul.mubr.f32.gmra.mxu0 %v1116
    %v1192 = vpop.f32.mrf.mxu0
    %v1193 = vadd.f32 0.0, %v1192
    %v1194 = vpop.f32.mrf.mxu0
    %v1195 = vadd.f32 0.0, %v1194
    %1196 = vdwg.mxu0
    %1197 = vmatprep.subr.mxu0 %v166
    %1198 = vmatpush1.msra.mxu0 %v165
    %1199 = vmatprep.subr.mxu0 %v162
    %1200 = vmatpush1.msra.mxu0 %v161
    %1201 = vmatprep.subr.mxu0 %v158
    %1202 = vmatpush1.msra.mxu0 %v157
    %1203 = vmatprep.subr.mxu0 %v154
    %1204 = vmatpush1.msra.mxu0 %v153
    %1205 = vmatprep.subr.mxu0 %v150
    %1206 = vmatpush1.msra.mxu0 %v149
    %1207 = vmatprep.subr.mxu0 %v146
    %1208 = vmatpush1.msra.mxu0 %v145
    %1209 = vmatprep.subr.mxu0 %v142
    %1210 = vmatpush1.msra.mxu0 %v141
    %1211 = vmatprep.subr.mxu0 %v138
    %1212 = vmatpush1.msra.mxu0 %v137
    %1213 = vmatprep.subr.mxu0 %v134
    %1214 = vmatpush1.msra.mxu0 %v133
    %1215 = vmatprep.subr.mxu0 %v130
    %1216 = vmatpush1.msra.mxu0 %v129
    %1217 = vmatprep.subr.mxu0 %v126
    %1218 = vmatpush1.msra.mxu0 %v125
    %1219 = vmatprep.subr.mxu0 %v122
    %1220 = vmatpush1.msra.mxu0 %v121
    %1221 = vmatprep.subr.mxu0 %v118
    %1222 = vmatpush1.msra.mxu0 %v117
    %1223 = vmatprep.subr.mxu0 %v114
    %1224 = vmatpush1.msra.mxu0 %v113
    %1225 = vmatprep.subr.mxu0 %v110
    %1226 = vmatpush1.msra.mxu0 %v109
    %1227 = vmatprep.subr.mxu0 %v106
    %1228 = vmatpush1.msra.mxu0 %v105
    %1229 = vmatprep.subr.mxu0 0.0
    %1230 = vmatpush2.msra.mxu0 0.0
    %1231 = vmatprep.subr.mxu0 0.0
    %1232 = vmatpush2.msra.mxu0 0.0
    %1233 = vmatprep.subr.mxu0 0.0
    %1234 = vmatpush2.msra.mxu0 0.0
    %1235 = vmatprep.subr.mxu0 0.0
    %1236 = vmatpush2.msra.mxu0 0.0
    %1237 = vmatprep.subr.mxu0 0.0
    %1238 = vmatpush2.msra.mxu0 0.0
    %1239 = vmatprep.subr.mxu0 0.0
    %1240 = vmatpush2.msra.mxu0 0.0
    %1241 = vmatprep.subr.mxu0 0.0
    %1242 = vmatpush2.msra.mxu0 0.0
    %1243 = vmatprep.subr.mxu0 0.0
    %1244 = vmatpush2.msra.mxu0 0.0
    %1245 = vmatprep.subr.mxu0 0.0
    %1246 = vmatpush2.msra.mxu0 0.0
    %1247 = vmatprep.subr.mxu0 0.0
    %1248 = vmatpush2.msra.mxu0 0.0
    %1249 = vmatprep.subr.mxu0 0.0
    %1250 = vmatpush2.msra.mxu0 0.0
    %1251 = vmatprep.subr.mxu0 0.0
    %1252 = vmatpush2.msra.mxu0 0.0
    %1253 = vmatprep.subr.mxu0 0.0
    %1254 = vmatpush2.msra.mxu0 0.0
    %1255 = vmatprep.subr.mxu0 0.0
    %1256 = vmatpush2.msra.mxu0 0.0
    %1257 = vmatprep.subr.mxu0 0.0
    %1258 = vmatpush2.msra.mxu0 0.0
    %1259 = vmatprep.subr.mxu0 0.0
    %1260 = vmatpush2.msra.mxu0 0.0
    %1261 = vmatprep.mubr.f32.mxu0 0.0
    %1262 = vmatmul.mubr.f32.gmra.mxu0 %v1116
    %v1263 = vpop.f32.mrf.mxu0
    %v1264 = vadd.f32 0.0, %v1263
    %v1265 = vpop.f32.mrf.mxu0
    %v1266 = vadd.f32 0.0, %v1265
    %1267 = vdwg.mxu0
    %v1268 = vadd.f32 %v1122, %v1193
    %v1269 = vadd.f32 %v1123, %v1195
    %v1270 = vadd.f32 %v1124, %v1264
    %v1271 = vadd.f32 %v1125, %v1266
    %v1272 = vtanh.pop %v1268
    %v1273 = vtanh.pop %v1269
    %v1274 = vtanh.pop %v1270
    %v1275 = vtanh.pop %v1271
    %v1276 = vmul.f32 %v1272, 0.5
    %v1277 = vadd.f32 %v1276, 0.5
    %v1278 = vmul.f32 %v1273, 0.5
    %v1279 = vadd.f32 %v1278, 0.5
    %v1280 = vmul.f32 %v1275, 0.5
    %v1281 = vadd.f32 %v1280, 0.5
    %v1282 = vmul.f32 %v1279, %v1114
    %v1283 = vmul.f32 %v1277, %v1274
    %v1284 = vadd.f32 %v1282, %v1283
    %v1285 = vtanh.pop %v1284
    %v1286 = vmul.f32 %v1281, %v1285
    %s1287 = scalar_lea.vmem [#allocation3], 24
    %1288 = vst [vmem:[%s1287] sm:$0xff] %v1286
    %s1289 = smul.u32 4, 4
    %s1290 = smul.addr %s1289, 8
    %s1291 = scalar_lea.vmem [#allocation2], %s1290
    %v1292 = vld [vmem:[%s1291] sm:$0xff]
    %v1293 = vld [vmem:[%s1291 + $0x8] sm:$0xff]
    %v1294 = vld [vmem:[%s1291 + $0x10] sm:$0xff]
    %v1295 = vld [vmem:[%s1291 + $0x18] sm:$0xff]
    %1296 = vmatprep.subr.mxu0 %v164
    %1297 = vmatpush1.msra.mxu0 %v163
    %1298 = vmatprep.subr.mxu0 %v160
    %1299 = vmatpush1.msra.mxu0 %v159
    %1300 = vmatprep.subr.mxu0 %v156
    %1301 = vmatpush1.msra.mxu0 %v155
    %1302 = vmatprep.subr.mxu0 %v152
    %1303 = vmatpush1.msra.mxu0 %v151
    %1304 = vmatprep.subr.mxu0 %v148
    %1305 = vmatpush1.msra.mxu0 %v147
    %1306 = vmatprep.subr.mxu0 %v144
    %1307 = vmatpush1.msra.mxu0 %v143
    %1308 = vmatprep.subr.mxu0 %v140
    %1309 = vmatpush1.msra.mxu0 %v139
    %1310 = vmatprep.subr.mxu0 %v136
    %1311 = vmatpush1.msra.mxu0 %v135
    %1312 = vmatprep.subr.mxu0 %v132
    %1313 = vmatpush1.msra.mxu0 %v131
    %1314 = vmatprep.subr.mxu0 %v128
    %1315 = vmatpush1.msra.mxu0 %v127
    %1316 = vmatprep.subr.mxu0 %v124
    %1317 = vmatpush1.msra.mxu0 %v123
    %1318 = vmatprep.subr.mxu0 %v120
    %1319 = vmatpush1.msra.mxu0 %v119
    %1320 = vmatprep.subr.mxu0 %v116
    %1321 = vmatpush1.msra.mxu0 %v115
    %1322 = vmatprep.subr.mxu0 %v112
    %1323 = vmatpush1.msra.mxu0 %v111
    %1324 = vmatprep.subr.mxu0 %v108
    %1325 = vmatpush1.msra.mxu0 %v107
    %1326 = vmatprep.subr.mxu0 %v104
    %1327 = vmatpush1.msra.mxu0 %v103
    %1328 = vmatprep.subr.mxu0 0.0
    %1329 = vmatpush2.msra.mxu0 0.0
    %1330 = vmatprep.subr.mxu0 0.0
    %1331 = vmatpush2.msra.mxu0 0.0
    %1332 = vmatprep.subr.mxu0 0.0
    %1333 = vmatpush2.msra.mxu0 0.0
    %1334 = vmatprep.subr.mxu0 0.0
    %1335 = vmatpush2.msra.mxu0 0.0
    %1336 = vmatprep.subr.mxu0 0.0
    %1337 = vmatpush2.msra.mxu0 0.0
    %1338 = vmatprep.subr.mxu0 0.0
    %1339 = vmatpush2.msra.mxu0 0.0
    %1340 = vmatprep.subr.mxu0 0.0
    %1341 = vmatpush2.msra.mxu0 0.0
    %1342 = vmatprep.subr.mxu0 0.0
    %1343 = vmatpush2.msra.mxu0 0.0
    %1344 = vmatprep.subr.mxu0 0.0
    %1345 = vmatpush2.msra.mxu0 0.0
    %1346 = vmatprep.subr.mxu0 0.0
    %1347 = vmatpush2.msra.mxu0 0.0
    %1348 = vmatprep.subr.mxu0 0.0
    %1349 = vmatpush2.msra.mxu0 0.0
    %1350 = vmatprep.subr.mxu0 0.0
    %1351 = vmatpush2.msra.mxu0 0.0
    %1352 = vmatprep.subr.mxu0 0.0
    %1353 = vmatpush2.msra.mxu0 0.0
    %1354 = vmatprep.subr.mxu0 0.0
    %1355 = vmatpush2.msra.mxu0 0.0
    %1356 = vmatprep.subr.mxu0 0.0
    %1357 = vmatpush2.msra.mxu0 0.0
    %1358 = vmatprep.subr.mxu0 0.0
    %1359 = vmatpush2.msra.mxu0 0.0
    %1360 = vmatprep.mubr.f32.mxu0 0.0
    %1361 = vmatmul.mubr.f32.gmra.mxu0 %v1286
    %v1362 = vpop.f32.mrf.mxu0
    %v1363 = vadd.f32 0.0, %v1362
    %v1364 = vpop.f32.mrf.mxu0
    %v1365 = vadd.f32 0.0, %v1364
    %1366 = vdwg.mxu0
    %1367 = vmatprep.subr.mxu0 %v166
    %1368 = vmatpush1.msra.mxu0 %v165
    %1369 = vmatprep.subr.mxu0 %v162
    %1370 = vmatpush1.msra.mxu0 %v161
    %1371 = vmatprep.subr.mxu0 %v158
    %1372 = vmatpush1.msra.mxu0 %v157
    %1373 = vmatprep.subr.mxu0 %v154
    %1374 = vmatpush1.msra.mxu0 %v153
    %1375 = vmatprep.subr.mxu0 %v150
    %1376 = vmatpush1.msra.mxu0 %v149
    %1377 = vmatprep.subr.mxu0 %v146
    %1378 = vmatpush1.msra.mxu0 %v145
    %1379 = vmatprep.subr.mxu0 %v142
    %1380 = vmatpush1.msra.mxu0 %v141
    %1381 = vmatprep.subr.mxu0 %v138
    %1382 = vmatpush1.msra.mxu0 %v137
    %1383 = vmatprep.subr.mxu0 %v134
    %1384 = vmatpush1.msra.mxu0 %v133
    %1385 = vmatprep.subr.mxu0 %v130
    %1386 = vmatpush1.msra.mxu0 %v129
    %1387 = vmatprep.subr.mxu0 %v126
    %1388 = vmatpush1.msra.mxu0 %v125
    %1389 = vmatprep.subr.mxu0 %v122
    %1390 = vmatpush1.msra.mxu0 %v121
    %1391 = vmatprep.subr.mxu0 %v118
    %1392 = vmatpush1.msra.mxu0 %v117
    %1393 = vmatprep.subr.mxu0 %v114
    %1394 = vmatpush1.msra.mxu0 %v113
    %1395 = vmatprep.subr.mxu0 %v110
    %1396 = vmatpush1.msra.mxu0 %v109
    %1397 = vmatprep.subr.mxu0 %v106
    %1398 = vmatpush1.msra.mxu0 %v105
    %1399 = vmatprep.subr.mxu0 0.0
    %1400 = vmatpush2.msra.mxu0 0.0
    %1401 = vmatprep.subr.mxu0 0.0
    %1402 = vmatpush2.msra.mxu0 0.0
    %1403 = vmatprep.subr.mxu0 0.0
    %1404 = vmatpush2.msra.mxu0 0.0
    %1405 = vmatprep.subr.mxu0 0.0
    %1406 = vmatpush2.msra.mxu0 0.0
    %1407 = vmatprep.subr.mxu0 0.0
    %1408 = vmatpush2.msra.mxu0 0.0
    %1409 = vmatprep.subr.mxu0 0.0
    %1410 = vmatpush2.msra.mxu0 0.0
    %1411 = vmatprep.subr.mxu0 0.0
    %1412 = vmatpush2.msra.mxu0 0.0
    %1413 = vmatprep.subr.mxu0 0.0
    %1414 = vmatpush2.msra.mxu0 0.0
    %1415 = vmatprep.subr.mxu0 0.0
    %1416 = vmatpush2.msra.mxu0 0.0
    %1417 = vmatprep.subr.mxu0 0.0
    %1418 = vmatpush2.msra.mxu0 0.0
    %1419 = vmatprep.subr.mxu0 0.0
    %1420 = vmatpush2.msra.mxu0 0.0
    %1421 = vmatprep.subr.mxu0 0.0
    %1422 = vmatpush2.msra.mxu0 0.0
    %1423 = vmatprep.subr.mxu0 0.0
    %1424 = vmatpush2.msra.mxu0 0.0
    %1425 = vmatprep.subr.mxu0 0.0
    %1426 = vmatpush2.msra.mxu0 0.0
    %1427 = vmatprep.subr.mxu0 0.0
    %1428 = vmatpush2.msra.mxu0 0.0
    %1429 = vmatprep.subr.mxu0 0.0
    %1430 = vmatpush2.msra.mxu0 0.0
    %1431 = vmatprep.mubr.f32.mxu0 0.0
    %1432 = vmatmul.mubr.f32.gmra.mxu0 %v1286
    %v1433 = vpop.f32.mrf.mxu0
    %v1434 = vadd.f32 0.0, %v1433
    %v1435 = vpop.f32.mrf.mxu0
    %v1436 = vadd.f32 0.0, %v1435
    %1437 = vdwg.mxu0
    %v1438 = vadd.f32 %v1292, %v1363
    %v1439 = vadd.f32 %v1293, %v1365
    %v1440 = vadd.f32 %v1294, %v1434
    %v1441 = vadd.f32 %v1295, %v1436
    %v1442 = vtanh.pop %v1438
    %v1443 = vtanh.pop %v1439
    %v1444 = vtanh.pop %v1440
    %v1445 = vtanh.pop %v1441
    %v1446 = vmul.f32 %v1442, 0.5
    %v1447 = vadd.f32 %v1446, 0.5
    %v1448 = vmul.f32 %v1443, 0.5
    %v1449 = vadd.f32 %v1448, 0.5
    %v1450 = vmul.f32 %v1445, 0.5
    %v1451 = vadd.f32 %v1450, 0.5
    %v1452 = vmul.f32 %v1449, %v1284
    %v1453 = vmul.f32 %v1447, %v1444
    %v1454 = vadd.f32 %v1452, %v1453
    %v1455 = vtanh.pop %v1454
    %v1456 = vmul.f32 %v1451, %v1455
    %s1457 = scalar_lea.vmem [#allocation3], 32
    %1458 = vst [vmem:[%s1457] sm:$0xff] %v1456
    %s1459 = smul.u32 5, 4
    %s1460 = smul.addr %s1459, 8
    %s1461 = scalar_lea.vmem [#allocation2], %s1460
    %v1462 = vld [vmem:[%s1461] sm:$0xff]
    %v1463 = vld [vmem:[%s1461 + $0x8] sm:$0xff]
    %v1464 = vld [vmem:[%s1461 + $0x10] sm:$0xff]
    %v1465 = vld [vmem:[%s1461 + $0x18] sm:$0xff]
    %1466 = vmatprep.subr.mxu0 %v164
    %1467 = vmatpush1.msra.mxu0 %v163
    %1468 = vmatprep.subr.mxu0 %v160
    %1469 = vmatpush1.msra.mxu0 %v159
    %1470 = vmatprep.subr.mxu0 %v156
    %1471 = vmatpush1.msra.mxu0 %v155
    %1472 = vmatprep.subr.mxu0 %v152
    %1473 = vmatpush1.msra.mxu0 %v151
    %1474 = vmatprep.subr.mxu0 %v148
    %1475 = vmatpush1.msra.mxu0 %v147
    %1476 = vmatprep.subr.mxu0 %v144
    %1477 = vmatpush1.msra.mxu0 %v143
    %1478 = vmatprep.subr.mxu0 %v140
    %1479 = vmatpush1.msra.mxu0 %v139
    %1480 = vmatprep.subr.mxu0 %v136
    %1481 = vmatpush1.msra.mxu0 %v135
    %1482 = vmatprep.subr.mxu0 %v132
    %1483 = vmatpush1.msra.mxu0 %v131
    %1484 = vmatprep.subr.mxu0 %v128
    %1485 = vmatpush1.msra.mxu0 %v127
    %1486 = vmatprep.subr.mxu0 %v124
    %1487 = vmatpush1.msra.mxu0 %v123
    %1488 = vmatprep.subr.mxu0 %v120
    %1489 = vmatpush1.msra.mxu0 %v119
    %1490 = vmatprep.subr.mxu0 %v116
    %1491 = vmatpush1.msra.mxu0 %v115
    %1492 = vmatprep.subr.mxu0 %v112
    %1493 = vmatpush1.msra.mxu0 %v111
    %1494 = vmatprep.subr.mxu0 %v108
    %1495 = vmatpush1.msra.mxu0 %v107
    %1496 = vmatprep.subr.mxu0 %v104
    %1497 = vmatpush1.msra.mxu0 %v103
    %1498 = vmatprep.subr.mxu0 0.0
    %1499 = vmatpush2.msra.mxu0 0.0
    %1500 = vmatprep.subr.mxu0 0.0
    %1501 = vmatpush2.msra.mxu0 0.0
    %1502 = vmatprep.subr.mxu0 0.0
    %1503 = vmatpush2.msra.mxu0 0.0
    %1504 = vmatprep.subr.mxu0 0.0
    %1505 = vmatpush2.msra.mxu0 0.0
    %1506 = vmatprep.subr.mxu0 0.0
    %1507 = vmatpush2.msra.mxu0 0.0
    %1508 = vmatprep.subr.mxu0 0.0
    %1509 = vmatpush2.msra.mxu0 0.0
    %1510 = vmatprep.subr.mxu0 0.0
    %1511 = vmatpush2.msra.mxu0 0.0
    %1512 = vmatprep.subr.mxu0 0.0
    %1513 = vmatpush2.msra.mxu0 0.0
    %1514 = vmatprep.subr.mxu0 0.0
    %1515 = vmatpush2.msra.mxu0 0.0
    %1516 = vmatprep.subr.mxu0 0.0
    %1517 = vmatpush2.msra.mxu0 0.0
    %1518 = vmatprep.subr.mxu0 0.0
    %1519 = vmatpush2.msra.mxu0 0.0
    %1520 = vmatprep.subr.mxu0 0.0
    %1521 = vmatpush2.msra.mxu0 0.0
    %1522 = vmatprep.subr.mxu0 0.0
    %1523 = vmatpush2.msra.mxu0 0.0
    %1524 = vmatprep.subr.mxu0 0.0
    %1525 = vmatpush2.msra.mxu0 0.0
    %1526 = vmatprep.subr.mxu0 0.0
    %1527 = vmatpush2.msra.mxu0 0.0
    %1528 = vmatprep.subr.mxu0 0.0
    %1529 = vmatpush2.msra.mxu0 0.0
    %1530 = vmatprep.mubr.f32.mxu0 0.0
    %1531 = vmatmul.mubr.f32.gmra.mxu0 %v1456
    %v1532 = vpop.f32.mrf.mxu0
    %v1533 = vadd.f32 0.0, %v1532
    %v1534 = vpop.f32.mrf.mxu0
    %v1535 = vadd.f32 0.0, %v1534
    %1536 = vdwg.mxu0
    %1537 = vmatprep.subr.mxu0 %v166
    %1538 = vmatpush1.msra.mxu0 %v165
    %1539 = vmatprep.subr.mxu0 %v162
    %1540 = vmatpush1.msra.mxu0 %v161
    %1541 = vmatprep.subr.mxu0 %v158
    %1542 = vmatpush1.msra.mxu0 %v157
    %1543 = vmatprep.subr.mxu0 %v154
    %1544 = vmatpush1.msra.mxu0 %v153
    %1545 = vmatprep.subr.mxu0 %v150
    %1546 = vmatpush1.msra.mxu0 %v149
    %1547 = vmatprep.subr.mxu0 %v146
    %1548 = vmatpush1.msra.mxu0 %v145
    %1549 = vmatprep.subr.mxu0 %v142
    %1550 = vmatpush1.msra.mxu0 %v141
    %1551 = vmatprep.subr.mxu0 %v138
    %1552 = vmatpush1.msra.mxu0 %v137
    %1553 = vmatprep.subr.mxu0 %v134
    %1554 = vmatpush1.msra.mxu0 %v133
    %1555 = vmatprep.subr.mxu0 %v130
    %1556 = vmatpush1.msra.mxu0 %v129
    %1557 = vmatprep.subr.mxu0 %v126
    %1558 = vmatpush1.msra.mxu0 %v125
    %1559 = vmatprep.subr.mxu0 %v122
    %1560 = vmatpush1.msra.mxu0 %v121
    %1561 = vmatprep.subr.mxu0 %v118
    %1562 = vmatpush1.msra.mxu0 %v117
    %1563 = vmatprep.subr.mxu0 %v114
    %1564 = vmatpush1.msra.mxu0 %v113
    %1565 = vmatprep.subr.mxu0 %v110
    %1566 = vmatpush1.msra.mxu0 %v109
    %1567 = vmatprep.subr.mxu0 %v106
    %1568 = vmatpush1.msra.mxu0 %v105
    %1569 = vmatprep.subr.mxu0 0.0
    %1570 = vmatpush2.msra.mxu0 0.0
    %1571 = vmatprep.subr.mxu0 0.0
    %1572 = vmatpush2.msra.mxu0 0.0
    %1573 = vmatprep.subr.mxu0 0.0
    %1574 = vmatpush2.msra.mxu0 0.0
    %1575 = vmatprep.subr.mxu0 0.0
    %1576 = vmatpush2.msra.mxu0 0.0
    %1577 = vmatprep.subr.mxu0 0.0
    %1578 = vmatpush2.msra.mxu0 0.0
    %1579 = vmatprep.subr.mxu0 0.0
    %1580 = vmatpush2.msra.mxu0 0.0
    %1581 = vmatprep.subr.mxu0 0.0
    %1582 = vmatpush2.msra.mxu0 0.0
    %1583 = vmatprep.subr.mxu0 0.0
    %1584 = vmatpush2.msra.mxu0 0.0
    %1585 = vmatprep.subr.mxu0 0.0
    %1586 = vmatpush2.msra.mxu0 0.0
    %1587 = vmatprep.subr.mxu0 0.0
    %1588 = vmatpush2.msra.mxu0 0.0
    %1589 = vmatprep.subr.mxu0 0.0
    %1590 = vmatpush2.msra.mxu0 0.0
    %1591 = vmatprep.subr.mxu0 0.0
    %1592 = vmatpush2.msra.mxu0 0.0
    %1593 = vmatprep.subr.mxu0 0.0
    %1594 = vmatpush2.msra.mxu0 0.0
    %1595 = vmatprep.subr.mxu0 0.0
    %1596 = vmatpush2.msra.mxu0 0.0
    %1597 = vmatprep.subr.mxu0 0.0
    %1598 = vmatpush2.msra.mxu0 0.0
    %1599 = vmatprep.subr.mxu0 0.0
    %1600 = vmatpush2.msra.mxu0 0.0
    %1601 = vmatprep.mubr.f32.mxu0 0.0
    %1602 = vmatmul.mubr.f32.gmra.mxu0 %v1456
    %v1603 = vpop.f32.mrf.mxu0
    %v1604 = vadd.f32 0.0, %v1603
    %v1605 = vpop.f32.mrf.mxu0
    %v1606 = vadd.f32 0.0, %v1605
    %1607 = vdwg.mxu0
    %v1608 = vadd.f32 %v1462, %v1533
    %v1609 = vadd.f32 %v1463, %v1535
    %v1610 = vadd.f32 %v1464, %v1604
    %v1611 = vadd.f32 %v1465, %v1606
    %v1612 = vtanh.pop %v1608
    %v1613 = vtanh.pop %v1609
    %v1614 = vtanh.pop %v1610
    %v1615 = vtanh.pop %v1611
    %v1616 = vmul.f32 %v1612, 0.5
    %v1617 = vadd.f32 %v1616, 0.5
    %v1618 = vmul.f32 %v1613, 0.5
    %v1619 = vadd.f32 %v1618, 0.5
    %v1620 = vmul.f32 %v1615, 0.5
    %v1621 = vadd.f32 %v1620, 0.5
    %v1622 = vmul.f32 %v1619, %v1454
    %v1623 = vmul.f32 %v1617, %v1614
    %v1624 = vadd.f32 %v1622, %v1623
    %v1625 = vtanh.pop %v1624
    %v1626 = vmul.f32 %v1621, %v1625
    %s1627 = scalar_lea.vmem [#allocation3], 40
    %1628 = vst [vmem:[%s1627] sm:$0xff] %v1626
    %s1629 = smul.u32 6, 4
    %s1630 = smul.addr %s1629, 8
    %s1631 = scalar_lea.vmem [#allocation2], %s1630
    %v1632 = vld [vmem:[%s1631] sm:$0xff]
    %v1633 = vld [vmem:[%s1631 + $0x8] sm:$0xff]
    %v1634 = vld [vmem:[%s1631 + $0x10] sm:$0xff]
    %v1635 = vld [vmem:[%s1631 + $0x18] sm:$0xff]
    %1636 = vmatprep.subr.mxu0 %v164
    %1637 = vmatpush1.msra.mxu0 %v163
    %1638 = vmatprep.subr.mxu0 %v160
    %1639 = vmatpush1.msra.mxu0 %v159
    %1640 = vmatprep.subr.mxu0 %v156
    %1641 = vmatpush1.msra.mxu0 %v155
    %1642 = vmatprep.subr.mxu0 %v152
    %1643 = vmatpush1.msra.mxu0 %v151
    %1644 = vmatprep.subr.mxu0 %v148
    %1645 = vmatpush1.msra.mxu0 %v147
    %1646 = vmatprep.subr.mxu0 %v144
    %1647 = vmatpush1.msra.mxu0 %v143
    %1648 = vmatprep.subr.mxu0 %v140
    %1649 = vmatpush1.msra.mxu0 %v139
    %1650 = vmatprep.subr.mxu0 %v136
    %1651 = vmatpush1.msra.mxu0 %v135
    %1652 = vmatprep.subr.mxu0 %v132
    %1653 = vmatpush1.msra.mxu0 %v131
    %1654 = vmatprep.subr.mxu0 %v128
    %1655 = vmatpush1.msra.mxu0 %v127
    %1656 = vmatprep.subr.mxu0 %v124
    %1657 = vmatpush1.msra.mxu0 %v123
    %1658 = vmatprep.subr.mxu0 %v120
    %1659 = vmatpush1.msra.mxu0 %v119
    %1660 = vmatprep.subr.mxu0 %v116
    %1661 = vmatpush1.msra.mxu0 %v115
    %1662 = vmatprep.subr.mxu0 %v112
    %1663 = vmatpush1.msra.mxu0 %v111
    %1664 = vmatprep.subr.mxu0 %v108
    %1665 = vmatpush1.msra.mxu0 %v107
    %1666 = vmatprep.subr.mxu0 %v104
    %1667 = vmatpush1.msra.mxu0 %v103
    %1668 = vmatprep.subr.mxu0 0.0
    %1669 = vmatpush2.msra.mxu0 0.0
    %1670 = vmatprep.subr.mxu0 0.0
    %1671 = vmatpush2.msra.mxu0 0.0
    %1672 = vmatprep.subr.mxu0 0.0
    %1673 = vmatpush2.msra.mxu0 0.0
    %1674 = vmatprep.subr.mxu0 0.0
    %1675 = vmatpush2.msra.mxu0 0.0
    %1676 = vmatprep.subr.mxu0 0.0
    %1677 = vmatpush2.msra.mxu0 0.0
    %1678 = vmatprep.subr.mxu0 0.0
    %1679 = vmatpush2.msra.mxu0 0.0
    %1680 = vmatprep.subr.mxu0 0.0
    %1681 = vmatpush2.msra.mxu0 0.0
    %1682 = vmatprep.subr.mxu0 0.0
    %1683 = vmatpush2.msra.mxu0 0.0
    %1684 = vmatprep.subr.mxu0 0.0
    %1685 = vmatpush2.msra.mxu0 0.0
    %1686 = vmatprep.subr.mxu0 0.0
    %1687 = vmatpush2.msra.mxu0 0.0
    %1688 = vmatprep.subr.mxu0 0.0
    %1689 = vmatpush2.msra.mxu0 0.0
    %1690 = vmatprep.subr.mxu0 0.0
    %1691 = vmatpush2.msra.mxu0 0.0
    %1692 = vmatprep.subr.mxu0 0.0
    %1693 = vmatpush2.msra.mxu0 0.0
    %1694 = vmatprep.subr.mxu0 0.0
    %1695 = vmatpush2.msra.mxu0 0.0
    %1696 = vmatprep.subr.mxu0 0.0
    %1697 = vmatpush2.msra.mxu0 0.0
    %1698 = vmatprep.subr.mxu0 0.0
    %1699 = vmatpush2.msra.mxu0 0.0
    %1700 = vmatprep.mubr.f32.mxu0 0.0
    %1701 = vmatmul.mubr.f32.gmra.mxu0 %v1626
    %v1702 = vpop.f32.mrf.mxu0
    %v1703 = vadd.f32 0.0, %v1702
    %v1704 = vpop.f32.mrf.mxu0
    %v1705 = vadd.f32 0.0, %v1704
    %1706 = vdwg.mxu0
    %1707 = vmatprep.subr.mxu0 %v166
    %1708 = vmatpush1.msra.mxu0 %v165
    %1709 = vmatprep.subr.mxu0 %v162
    %1710 = vmatpush1.msra.mxu0 %v161
    %1711 = vmatprep.subr.mxu0 %v158
    %1712 = vmatpush1.msra.mxu0 %v157
    %1713 = vmatprep.subr.mxu0 %v154
    %1714 = vmatpush1.msra.mxu0 %v153
    %1715 = vmatprep.subr.mxu0 %v150
    %1716 = vmatpush1.msra.mxu0 %v149
    %1717 = vmatprep.subr.mxu0 %v146
    %1718 = vmatpush1.msra.mxu0 %v145
    %1719 = vmatprep.subr.mxu0 %v142
    %1720 = vmatpush1.msra.mxu0 %v141
    %1721 = vmatprep.subr.mxu0 %v138
    %1722 = vmatpush1.msra.mxu0 %v137
    %1723 = vmatprep.subr.mxu0 %v134
    %1724 = vmatpush1.msra.mxu0 %v133
    %1725 = vmatprep.subr.mxu0 %v130
    %1726 = vmatpush1.msra.mxu0 %v129
    %1727 = vmatprep.subr.mxu0 %v126
    %1728 = vmatpush1.msra.mxu0 %v125
    %1729 = vmatprep.subr.mxu0 %v122
    %1730 = vmatpush1.msra.mxu0 %v121
    %1731 = vmatprep.subr.mxu0 %v118
    %1732 = vmatpush1.msra.mxu0 %v117
    %1733 = vmatprep.subr.mxu0 %v114
    %1734 = vmatpush1.msra.mxu0 %v113
    %1735 = vmatprep.subr.mxu0 %v110
    %1736 = vmatpush1.msra.mxu0 %v109
    %1737 = vmatprep.subr.mxu0 %v106
    %1738 = vmatpush1.msra.mxu0 %v105
    %1739 = vmatprep.subr.mxu0 0.0
    %1740 = vmatpush2.msra.mxu0 0.0
    %1741 = vmatprep.subr.mxu0 0.0
    %1742 = vmatpush2.msra.mxu0 0.0
    %1743 = vmatprep.subr.mxu0 0.0
    %1744 = vmatpush2.msra.mxu0 0.0
    %1745 = vmatprep.subr.mxu0 0.0
    %1746 = vmatpush2.msra.mxu0 0.0
    %1747 = vmatprep.subr.mxu0 0.0
    %1748 = vmatpush2.msra.mxu0 0.0
    %1749 = vmatprep.subr.mxu0 0.0
    %1750 = vmatpush2.msra.mxu0 0.0
    %1751 = vmatprep.subr.mxu0 0.0
    %1752 = vmatpush2.msra.mxu0 0.0
    %1753 = vmatprep.subr.mxu0 0.0
    %1754 = vmatpush2.msra.mxu0 0.0
    %1755 = vmatprep.subr.mxu0 0.0
    %1756 = vmatpush2.msra.mxu0 0.0
    %1757 = vmatprep.subr.mxu0 0.0
    %1758 = vmatpush2.msra.mxu0 0.0
    %1759 = vmatprep.subr.mxu0 0.0
    %1760 = vmatpush2.msra.mxu0 0.0
    %1761 = vmatprep.subr.mxu0 0.0
    %1762 = vmatpush2.msra.mxu0 0.0
    %1763 = vmatprep.subr.mxu0 0.0
    %1764 = vmatpush2.msra.mxu0 0.0
    %1765 = vmatprep.subr.mxu0 0.0
    %1766 = vmatpush2.msra.mxu0 0.0
    %1767 = vmatprep.subr.mxu0 0.0
    %1768 = vmatpush2.msra.mxu0 0.0
    %1769 = vmatprep.subr.mxu0 0.0
    %1770 = vmatpush2.msra.mxu0 0.0
    %1771 = vmatprep.mubr.f32.mxu0 0.0
    %1772 = vmatmul.mubr.f32.gmra.mxu0 %v1626
    %v1773 = vpop.f32.mrf.mxu0
    %v1774 = vadd.f32 0.0, %v1773
    %v1775 = vpop.f32.mrf.mxu0
    %v1776 = vadd.f32 0.0, %v1775
    %1777 = vdwg.mxu0
    %v1778 = vadd.f32 %v1632, %v1703
    %v1779 = vadd.f32 %v1633, %v1705
    %v1780 = vadd.f32 %v1634, %v1774
    %v1781 = vadd.f32 %v1635, %v1776
    %v1782 = vtanh.pop %v1778
    %v1783 = vtanh.pop %v1779
    %v1784 = vtanh.pop %v1780
    %v1785 = vtanh.pop %v1781
    %v1786 = vmul.f32 %v1782, 0.5
    %v1787 = vadd.f32 %v1786, 0.5
    %v1788 = vmul.f32 %v1783, 0.5
    %v1789 = vadd.f32 %v1788, 0.5
    %v1790 = vmul.f32 %v1785, 0.5
    %v1791 = vadd.f32 %v1790, 0.5
    %v1792 = vmul.f32 %v1789, %v1624
    %v1793 = vmul.f32 %v1787, %v1784
    %v1794 = vadd.f32 %v1792, %v1793
    %v1795 = vtanh.pop %v1794
    %v1796 = vmul.f32 %v1791, %v1795
    %s1797 = scalar_lea.vmem [#allocation3], 48
    %1798 = vst [vmem:[%s1797] sm:$0xff] %v1796
    %s1799 = smul.u32 7, 4
    %s1800 = smul.addr %s1799, 8
    %s1801 = scalar_lea.vmem [#allocation2], %s1800
    %v1802 = vld [vmem:[%s1801] sm:$0xff]
    %v1803 = vld [vmem:[%s1801 + $0x8] sm:$0xff]
    %v1804 = vld [vmem:[%s1801 + $0x10] sm:$0xff]
    %v1805 = vld [vmem:[%s1801 + $0x18] sm:$0xff]
    %1806 = vmatprep.subr.mxu0 %v164
    %1807 = vmatpush1.msra.mxu0 %v163
    %1808 = vmatprep.subr.mxu0 %v160
    %1809 = vmatpush1.msra.mxu0 %v159
    %1810 = vmatprep.subr.mxu0 %v156
    %1811 = vmatpush1.msra.mxu0 %v155
    %1812 = vmatprep.subr.mxu0 %v152
    %1813 = vmatpush1.msra.mxu0 %v151
    %1814 = vmatprep.subr.mxu0 %v148
    %1815 = vmatpush1.msra.mxu0 %v147
    %1816 = vmatprep.subr.mxu0 %v144
    %1817 = vmatpush1.msra.mxu0 %v143
    %1818 = vmatprep.subr.mxu0 %v140
    %1819 = vmatpush1.msra.mxu0 %v139
    %1820 = vmatprep.subr.mxu0 %v136
    %1821 = vmatpush1.msra.mxu0 %v135
    %1822 = vmatprep.subr.mxu0 %v132
    %1823 = vmatpush1.msra.mxu0 %v131
    %1824 = vmatprep.subr.mxu0 %v128
    %1825 = vmatpush1.msra.mxu0 %v127
    %1826 = vmatprep.subr.mxu0 %v124
    %1827 = vmatpush1.msra.mxu0 %v123
    %1828 = vmatprep.subr.mxu0 %v120
    %1829 = vmatpush1.msra.mxu0 %v119
    %1830 = vmatprep.subr.mxu0 %v116
    %1831 = vmatpush1.msra.mxu0 %v115
    %1832 = vmatprep.subr.mxu0 %v112
    %1833 = vmatpush1.msra.mxu0 %v111
    %1834 = vmatprep.subr.mxu0 %v108
    %1835 = vmatpush1.msra.mxu0 %v107
    %1836 = vmatprep.subr.mxu0 %v104
    %1837 = vmatpush1.msra.mxu0 %v103
    %1838 = vmatprep.subr.mxu0 0.0
    %1839 = vmatpush2.msra.mxu0 0.0
    %1840 = vmatprep.subr.mxu0 0.0
    %1841 = vmatpush2.msra.mxu0 0.0
    %1842 = vmatprep.subr.mxu0 0.0
    %1843 = vmatpush2.msra.mxu0 0.0
    %1844 = vmatprep.subr.mxu0 0.0
    %1845 = vmatpush2.msra.mxu0 0.0
    %1846 = vmatprep.subr.mxu0 0.0
    %1847 = vmatpush2.msra.mxu0 0.0
    %1848 = vmatprep.subr.mxu0 0.0
    %1849 = vmatpush2.msra.mxu0 0.0
    %1850 = vmatprep.subr.mxu0 0.0
    %1851 = vmatpush2.msra.mxu0 0.0
    %1852 = vmatprep.subr.mxu0 0.0
    %1853 = vmatpush2.msra.mxu0 0.0
    %1854 = vmatprep.subr.mxu0 0.0
    %1855 = vmatpush2.msra.mxu0 0.0
    %1856 = vmatprep.subr.mxu0 0.0
    %1857 = vmatpush2.msra.mxu0 0.0
    %1858 = vmatprep.subr.mxu0 0.0
    %1859 = vmatpush2.msra.mxu0 0.0
    %1860 = vmatprep.subr.mxu0 0.0
    %1861 = vmatpush2.msra.mxu0 0.0
    %1862 = vmatprep.subr.mxu0 0.0
    %1863 = vmatpush2.msra.mxu0 0.0
    %1864 = vmatprep.subr.mxu0 0.0
    %1865 = vmatpush2.msra.mxu0 0.0
    %1866 = vmatprep.subr.mxu0 0.0
    %1867 = vmatpush2.msra.mxu0 0.0
    %1868 = vmatprep.subr.mxu0 0.0
    %1869 = vmatpush2.msra.mxu0 0.0
    %1870 = vmatprep.mubr.f32.mxu0 0.0
    %1871 = vmatmul.mubr.f32.gmra.mxu0 %v1796
    %v1872 = vpop.f32.mrf.mxu0
    %v1873 = vadd.f32 0.0, %v1872
    %v1874 = vpop.f32.mrf.mxu0
    %v1875 = vadd.f32 0.0, %v1874
    %1876 = vdwg.mxu0
    %1877 = vmatprep.subr.mxu0 %v166
    %1878 = vmatpush1.msra.mxu0 %v165
    %1879 = vmatprep.subr.mxu0 %v162
    %1880 = vmatpush1.msra.mxu0 %v161
    %1881 = vmatprep.subr.mxu0 %v158
    %1882 = vmatpush1.msra.mxu0 %v157
    %1883 = vmatprep.subr.mxu0 %v154
    %1884 = vmatpush1.msra.mxu0 %v153
    %1885 = vmatprep.subr.mxu0 %v150
    %1886 = vmatpush1.msra.mxu0 %v149
    %1887 = vmatprep.subr.mxu0 %v146
    %1888 = vmatpush1.msra.mxu0 %v145
    %1889 = vmatprep.subr.mxu0 %v142
    %1890 = vmatpush1.msra.mxu0 %v141
    %1891 = vmatprep.subr.mxu0 %v138
    %1892 = vmatpush1.msra.mxu0 %v137
    %1893 = vmatprep.subr.mxu0 %v134
    %1894 = vmatpush1.msra.mxu0 %v133
    %1895 = vmatprep.subr.mxu0 %v130
    %1896 = vmatpush1.msra.mxu0 %v129
    %1897 = vmatprep.subr.mxu0 %v126
    %1898 = vmatpush1.msra.mxu0 %v125
    %1899 = vmatprep.subr.mxu0 %v122
    %1900 = vmatpush1.msra.mxu0 %v121
    %1901 = vmatprep.subr.mxu0 %v118
    %1902 = vmatpush1.msra.mxu0 %v117
    %1903 = vmatprep.subr.mxu0 %v114
    %1904 = vmatpush1.msra.mxu0 %v113
    %1905 = vmatprep.subr.mxu0 %v110
    %1906 = vmatpush1.msra.mxu0 %v109
    %1907 = vmatprep.subr.mxu0 %v106
    %1908 = vmatpush1.msra.mxu0 %v105
    %1909 = vmatprep.subr.mxu0 0.0
    %1910 = vmatpush2.msra.mxu0 0.0
    %1911 = vmatprep.subr.mxu0 0.0
    %1912 = vmatpush2.msra.mxu0 0.0
    %1913 = vmatprep.subr.mxu0 0.0
    %1914 = vmatpush2.msra.mxu0 0.0
    %1915 = vmatprep.subr.mxu0 0.0
    %1916 = vmatpush2.msra.mxu0 0.0
    %1917 = vmatprep.subr.mxu0 0.0
    %1918 = vmatpush2.msra.mxu0 0.0
    %1919 = vmatprep.subr.mxu0 0.0
    %1920 = vmatpush2.msra.mxu0 0.0
    %1921 = vmatprep.subr.mxu0 0.0
    %1922 = vmatpush2.msra.mxu0 0.0
    %1923 = vmatprep.subr.mxu0 0.0
    %1924 = vmatpush2.msra.mxu0 0.0
    %1925 = vmatprep.subr.mxu0 0.0
    %1926 = vmatpush2.msra.mxu0 0.0
    %1927 = vmatprep.subr.mxu0 0.0
    %1928 = vmatpush2.msra.mxu0 0.0
    %1929 = vmatprep.subr.mxu0 0.0
    %1930 = vmatpush2.msra.mxu0 0.0
    %1931 = vmatprep.subr.mxu0 0.0
    %1932 = vmatpush2.msra.mxu0 0.0
    %1933 = vmatprep.subr.mxu0 0.0
    %1934 = vmatpush2.msra.mxu0 0.0
    %1935 = vmatprep.subr.mxu0 0.0
    %1936 = vmatpush2.msra.mxu0 0.0
    %1937 = vmatprep.subr.mxu0 0.0
    %1938 = vmatpush2.msra.mxu0 0.0
    %1939 = vmatprep.subr.mxu0 0.0
    %1940 = vmatpush2.msra.mxu0 0.0
    %1941 = vmatprep.mubr.f32.mxu0 0.0
    %1942 = vmatmul.mubr.f32.gmra.mxu0 %v1796
    %v1943 = vpop.f32.mrf.mxu0
    %v1944 = vadd.f32 0.0, %v1943
    %v1945 = vpop.f32.mrf.mxu0
    %v1946 = vadd.f32 0.0, %v1945
    %1947 = vdwg.mxu0
    %v1948 = vadd.f32 %v1802, %v1873
    %v1949 = vadd.f32 %v1803, %v1875
    %v1950 = vadd.f32 %v1804, %v1944
    %v1951 = vadd.f32 %v1805, %v1946
    %v1952 = vtanh.pop %v1948
    %v1953 = vtanh.pop %v1949
    %v1954 = vtanh.pop %v1950
    %v1955 = vtanh.pop %v1951
    %v1956 = vmul.f32 %v1952, 0.5
    %v1957 = vadd.f32 %v1956, 0.5
    %v1958 = vmul.f32 %v1953, 0.5
    %v1959 = vadd.f32 %v1958, 0.5
    %v1960 = vmul.f32 %v1955, 0.5
    %v1961 = vadd.f32 %v1960, 0.5
    %v1962 = vmul.f32 %v1959, %v1794
    %v1963 = vmul.f32 %v1957, %v1954
    %v1964 = vadd.f32 %v1962, %v1963
    %v1965 = vtanh.pop %v1964
    %v1966 = vmul.f32 %v1961, %v1965
    %s1967 = scalar_lea.vmem [#allocation3], 56
    %1968 = vst [vmem:[%s1967] sm:$0xff] %v1966
    %1969 = vst [vmem:[%s5] sm:$0xff] %v1966
    %1970 = vst [vmem:[%s6] sm:$0xff] %v1964
    %v1971 = vld [vmem:[#allocation3] sm:$0xff]
    %v1972 = vld [vmem:[#allocation3 + $0x8] sm:$0xff]
    %v1973 = vld [vmem:[#allocation3 + $0x10] sm:$0xff]
    %v1974 = vld [vmem:[#allocation3 + $0x18] sm:$0xff]
    %v1975 = vld [vmem:[#allocation3 + $0x20] sm:$0xff]
    %v1976 = vld [vmem:[#allocation3 + $0x28] sm:$0xff]
    %v1977 = vld [vmem:[#allocation3 + $0x30] sm:$0xff]
    %v1978 = vld [vmem:[#allocation3 + $0x38] sm:$0xff]
    %1979 = vmatprep.subr.mxu0 0.0
    %1980 = vmatpush1.msra.mxu0 %v182
    %1981 = vmatprep.subr.mxu0 0.0
    %1982 = vmatpush1.msra.mxu0 %v181
    %1983 = vmatprep.subr.mxu0 0.0
    %1984 = vmatpush1.msra.mxu0 %v180
    %1985 = vmatprep.subr.mxu0 0.0
    %1986 = vmatpush1.msra.mxu0 %v179
    %1987 = vmatprep.subr.mxu0 0.0
    %1988 = vmatpush1.msra.mxu0 %v178
    %1989 = vmatprep.subr.mxu0 0.0
    %1990 = vmatpush1.msra.mxu0 %v177
    %1991 = vmatprep.subr.mxu0 0.0
    %1992 = vmatpush1.msra.mxu0 %v176
    %1993 = vmatprep.subr.mxu0 0.0
    %1994 = vmatpush1.msra.mxu0 %v175
    %1995 = vmatprep.subr.mxu0 0.0
    %1996 = vmatpush1.msra.mxu0 %v174
    %1997 = vmatprep.subr.mxu0 0.0
    %1998 = vmatpush1.msra.mxu0 %v173
    %1999 = vmatprep.subr.mxu0 0.0
    %2000 = vmatpush1.msra.mxu0 %v172
    %2001 = vmatprep.subr.mxu0 0.0
    %2002 = vmatpush1.msra.mxu0 %v171
    %2003 = vmatprep.subr.mxu0 0.0
    %2004 = vmatpush1.msra.mxu0 %v170
    %2005 = vmatprep.subr.mxu0 0.0
    %2006 = vmatpush1.msra.mxu0 %v169
    %2007 = vmatprep.subr.mxu0 0.0
    %2008 = vmatpush1.msra.mxu0 %v168
    %2009 = vmatprep.subr.mxu0 0.0
    %2010 = vmatpush1.msra.mxu0 %v167
    %2011 = vmatprep.subr.mxu0 0.0
    %2012 = vmatpush2.msra.mxu0 0.0
    %2013 = vmatprep.subr.mxu0 0.0
    %2014 = vmatpush2.msra.mxu0 0.0
    %2015 = vmatprep.subr.mxu0 0.0
    %2016 = vmatpush2.msra.mxu0 0.0
    %2017 = vmatprep.subr.mxu0 0.0
    %2018 = vmatpush2.msra.mxu0 0.0
    %2019 = vmatprep.subr.mxu0 0.0
    %2020 = vmatpush2.msra.mxu0 0.0
    %2021 = vmatprep.subr.mxu0 0.0
    %2022 = vmatpush2.msra.mxu0 0.0
    %2023 = vmatprep.subr.mxu0 0.0
    %2024 = vmatpush2.msra.mxu0 0.0
    %2025 = vmatprep.subr.mxu0 0.0
    %2026 = vmatpush2.msra.mxu0 0.0
    %2027 = vmatprep.subr.mxu0 0.0
    %2028 = vmatpush2.msra.mxu0 0.0
    %2029 = vmatprep.subr.mxu0 0.0
    %2030 = vmatpush2.msra.mxu0 0.0
    %2031 = vmatprep.subr.mxu0 0.0
    %2032 = vmatpush2.msra.mxu0 0.0
    %2033 = vmatprep.subr.mxu0 0.0
    %2034 = vmatpush2.msra.mxu0 0.0
    %2035 = vmatprep.subr.mxu0 0.0
    %2036 = vmatpush2.msra.mxu0 0.0
    %2037 = vmatprep.subr.mxu0 0.0
    %2038 = vmatpush2.msra.mxu0 0.0
    %2039 = vmatprep.subr.mxu0 0.0
    %2040 = vmatpush2.msra.mxu0 0.0
    %2041 = vmatprep.subr.mxu0 0.0
    %2042 = vmatpush2.msra.mxu0 0.0
    %2043 = vmatprep.mubr.f32.mxu0 0.0
    %2044 = vmatmul.mubr.f32.gmra.mxu0 %v1971
    %v2045 = vpop.f32.mrf.mxu0
    %v2046 = vadd.f32 %v37, %v2045
    %v2047 = vpop.f32.mrf.mxu0
    %2048 = vmatprep.mubr.f32.mxu0 0.0
    %2049 = vmatmul.mubr.f32.gmra.mxu0 %v1972
    %v2050 = vpop.f32.mrf.mxu0
    %v2051 = vadd.f32 %v37, %v2050
    %v2052 = vpop.f32.mrf.mxu0
    %2053 = vmatprep.mubr.f32.mxu0 0.0
    %2054 = vmatmul.mubr.f32.gmra.mxu0 %v1973
    %v2055 = vpop.f32.mrf.mxu0
    %v2056 = vadd.f32 %v37, %v2055
    %v2057 = vpop.f32.mrf.mxu0
    %2058 = vmatprep.mubr.f32.mxu0 0.0
    %2059 = vmatmul.mubr.f32.gmra.mxu0 %v1974
    %v2060 = vpop.f32.mrf.mxu0
    %v2061 = vadd.f32 %v37, %v2060
    %v2062 = vpop.f32.mrf.mxu0
    %2063 = vmatprep.mubr.f32.mxu0 0.0
    %2064 = vmatmul.mubr.f32.gmra.mxu0 %v1975
    %v2065 = vpop.f32.mrf.mxu0
    %v2066 = vadd.f32 %v37, %v2065
    %v2067 = vpop.f32.mrf.mxu0
    %2068 = vmatprep.mubr.f32.mxu0 0.0
    %2069 = vmatmul.mubr.f32.gmra.mxu0 %v1976
    %v2070 = vpop.f32.mrf.mxu0
    %v2071 = vadd.f32 %v37, %v2070
    %v2072 = vpop.f32.mrf.mxu0
    %2073 = vmatprep.mubr.f32.mxu0 0.0
    %2074 = vmatmul.mubr.f32.gmra.mxu0 %v1977
    %v2075 = vpop.f32.mrf.mxu0
    %v2076 = vadd.f32 %v37, %v2075
    %v2077 = vpop.f32.mrf.mxu0
    %2078 = vmatprep.mubr.f32.mxu0 0.0
    %2079 = vmatmul.mubr.f32.gmra.mxu0 %v1978
    %v2080 = vpop.f32.mrf.mxu0
    %v2081 = vadd.f32 %v37, %v2080
    %v2082 = vpop.f32.mrf.mxu0
    %2083 = vdwg.mxu0
    %2084 = vst [vmem:[%s4] sm:$0xff] %v2046
    %2085 = vst [vmem:[%s4 + $0x8] sm:$0xff] %v2051
    %2086 = vst [vmem:[%s4 + $0x10] sm:$0xff] %v2056
    %2087 = vst [vmem:[%s4 + $0x18] sm:$0xff] %v2061
    %2088 = vst [vmem:[%s4 + $0x20] sm:$0xff] %v2066
    %2089 = vst [vmem:[%s4 + $0x28] sm:$0xff] %v2071
    %2090 = vst [vmem:[%s4 + $0x30] sm:$0xff] %v2076
    %2091 = vst [vmem:[%s4 + $0x38] sm:$0xff] %v2081
    // Predicated region
    $region22: #{critic_forward.1} parent=1 // pred_check
      _
    $region23: #{critic_forward.1} parent=1 // pred_check_branch
      %2093 = sbr.rel (0) target = $region25
    $region24: #{critic_forward.1} parent=1 // pred_region
      _
    $region25: #{critic_forward.1} parent=1 // pred_fallthru
      _
    // Predicated region
    $region26: #{critic_forward.1} parent=1 // pred_check
      _
    $region27: #{critic_forward.1} parent=1 // pred_check_branch
      %2095 = sbr.rel (0) target = $region29
    $region28: #{critic_forward.1} parent=1 // pred_region
      _
    $region29: #{critic_forward.1} parent=1 // pred_fallthru
      _
    // Predicated region
    $region30: #{critic_forward.1} parent=1 // pred_check
      _
    $region31: #{critic_forward.1} parent=1 // pred_check_branch
      %2097 = sbr.rel (0) target = $region33
    $region32: #{critic_forward.1} parent=1 // pred_region
      _
    $region33: #{critic_forward.1} parent=1 // pred_fallthru
      _
    // Predicated region
    $region34: #{critic_forward.1} parent=1 // pred_check
      _
    $region35: #{critic_forward.1} parent=1 // pred_check_branch
      %2099 = sbr.rel (0) target = $region37
    $region36: #{critic_forward.1} parent=1 // pred_region
      _
    $region37: #{critic_forward.1} parent=1 // pred_fallthru
      _
    // Predicated region
    $region38: #{critic_forward.1} parent=1 // pred_check
      _
    $region39: #{critic_forward.1} parent=1 // pred_check_branch
      %2101 = sbr.rel (0) target = $region41
    $region40: #{critic_forward.1} parent=1 // pred_region
      _
    $region41: #{critic_forward.1} parent=1 // pred_fallthru
      _
    // Predicated region
    $region42: #{critic_forward.1} parent=1 // pred_check
      _
    $region43: #{critic_forward.1} parent=1 // pred_check_branch
      %2103 = sbr.rel (0) target = $region45
    $region44: #{critic_forward.1} parent=1 // pred_region
      _
    $region45: #{critic_forward.1} parent=1 // pred_fallthru
      _
    %2104 = vsyncpa [#allocation5], 1

</llo_original>
